<compile_context>
chip_gen: v7x
topology: tpu7x:2x2x1
jax: 0.10.0
libtpu: 0.0.40
codegen_flags: <defaults>
</compile_context>

<pallas_src>
import jax
import jax.numpy as jnp
from jax.experimental import pallas as pl
from jax.experimental.pallas import tpu as pltpu

BN_EPS = 1e-5
LANE = 128


def _round_up(x, m):
    return ((x + m - 1) // m) * m


# ----------------------------------------------------------------------------
# Pallas kernel: one image x one row block per grid step (NHWC layout).
# ----------------------------------------------------------------------------
def _double_res_conv_kernel(p_ref, wc_ref, bc_ref, w2_ref, o_ref, hpad, col3):
    # p_ref : (1, TH+2, W, K1)      bf16  conv1 im2col patches (K1 = 9*Cin);
    #                                     row t <-> mid-activation row r*TH+t-1
    # wc_ref: (K1, Mid_p + Cout_p)  bf16  [BN1-folded w1 | ws at center tap]
    # bc_ref: (1,  Mid_p + Cout_p)  f32   [BN1-folded b1 | bs + BN2-folded b2]
    # w2_ref: (3, 3*Mid_p, Cout_p)  bf16  BN2-folded conv2 weight, (dx, c) flat
    # o_ref : (1, TH, W, Cout_p)    bf16  output row block (lane-dense)
    # hpad  : (TH+2, W+2, Mid_p)    bf16  zero-bordered mid activation scratch
    # col3  : (TH+2, W, 3*Mid_p)    bf16  dx-im2col scratch (3x, not 9x)
    _, TH, W, Cout_p = o_ref.shape
    R = TH + 2
    K1 = p_ref.shape[3]
    Mid3 = w2_ref.shape[1]
    Mid_p = Mid3 // 3
    f32 = jnp.float32
    bf16 = jnp.bfloat16

    r = pl.program_id(1)
    n_rb = pl.num_programs(1)

    # --- conv1 (3x3, pad=1, BN1 folded) + 1x1 skip: one fused MXU matmul -----
    # z[:, :Mid_p] = pre-ReLU mid activation for mid rows r*TH-1 .. r*TH+TH
    # z[:, Mid_p:] = skip + b2' (only the middle TH rows are consumed)
    z = jnp.dot(p_ref[...].reshape(R * W, K1), wc_ref[...],
                preferred_element_type=f32) + bc_ref[...]
    h = jnp.maximum(z[:, :Mid_p], 0.0).astype(bf16).reshape(R, W, Mid_p)
    skip = (z.reshape(R, W, Mid_p + Cout_p)[1:TH + 1, :, Mid_p:]
            .reshape(TH * W, Cout_p))

    # --- mid activation into the zero-bordered scratch ------------------------
    hpad[:, 1:W + 1, :] = h
    zero_col = jnp.zeros((R, 1, Mid_p), bf16)
    hpad[:, 0:1, :] = zero_col
    hpad[:, W + 1:W + 2, :] = zero_col

    # conv2 zero-pads the mid activation at the image top/bottom: the halo rows
    # computed from the host-padded dummy patch rows must be forced to zero.
    zero_row = jnp.zeros((1, W + 2, Mid_p), bf16)

    @pl.when(r == 0)
    def _():
        hpad[0:1, :, :] = zero_row

    @pl.when(r == n_rb - 1)
    def _():
        hpad[TH + 1:TH + 2, :, :] = zero_row

    # --- dx-only im2col: 3x replication instead of 9x ------------------------
    for dx in range(3):
        col3[:, :, dx * Mid_p:(dx + 1) * Mid_p] = hpad[:, dx:dx + W, :]

    # --- conv2 (3x3, pad=1, BN2 folded): 3 dy matmuls, K = 3*Mid_p -----------
    # f32 accumulator starts from the (skip + b2') term computed above.
    acc = skip
    for dy in range(3):
        acc = acc + jnp.dot(col3[dy:dy + TH].reshape(TH * W, Mid3), w2_ref[dy],
                            preferred_element_type=f32)

    # --- final ReLU; bf16 lane-dense output store -----------------------------
    o_ref[...] = jnp.maximum(acc, 0.0).reshape(1, TH, W, Cout_p).astype(o_ref.dtype)


# ----------------------------------------------------------------------------
# Wrapper: BN folding, weight fusion, host-side im2col + halo blocks, tiling.
# ----------------------------------------------------------------------------
def _fold_bn(w, b, gamma, beta, mean, var):
    """Fold eval-mode BatchNorm into a conv (w: (..., Cout), b: (Cout,))."""
    scale = gamma / jnp.sqrt(var + BN_EPS)
    return w * scale, (b - mean) * scale + beta


def _vmem_estimate(th, w, cin, mid_p, cout_p):
    """Rough per-step VMEM bytes: pipeline buffers + scratch + weights + temps."""
    r = th + 2
    k1_lanes = _round_up(max(9 * cin, LANE), LANE)   # lane-padded patch minor dim
    mc = mid_p + cout_p
    est = 0
    est += 2 * r * w * k1_lanes * 2          # double-buffered input patch blocks
    est += 2 * th * w * cout_p * 2           # double-buffered bf16 output blocks
    est += r * (w + 2) * mid_p * 2           # hpad scratch
    est += r * w * 3 * mid_p * 2             # col3 scratch
    est += 2 * (k1_lanes * mc + 9 * mid_p * cout_p + mc) * 4   # weights (generous)
    est += r * w * mc * 4                    # f32 z temporary
    est += 2 * th * w * cout_p * 4           # f32 accumulator temporaries
    return est


def _choose_row_block(n, h, w, cin, mid_p, cout_p,
                      budget=20 * 1024 * 1024, m_cap=4096):
    """Largest divisor of H fitting the VMEM budget; prefer >=4 grid steps."""
    divisors = [t for t in range(1, h + 1) if h % t == 0]
    feasible = [t for t in divisors
                if _vmem_estimate(t, w, cin, mid_p, cout_p) <= budget
                and t * w <= m_cap]
    if not feasible:
        feasible = [divisors[0]]
    for min_steps in (4, 2, 1):
        cand = [t for t in feasible if n * (h // t) >= min_steps]
        if cand:
            return max(cand)
    return max(feasible)


def double_res_conv(x_nchw, params):
    N, Cin, H, W = x_nchw.shape
    Mid = params["w1"].shape[3]
    Cout = params["w2"].shape[3]
    Mid_p = _round_up(Mid, LANE)
    Cout_p = _round_up(Cout, LANE)
    MC = Mid_p + Cout_p
    K1 = 9 * Cin

    # Fold eval-mode BN into both 3x3 convs.
    w1, b1 = _fold_bn(params["w1"], params["b1"], params["gamma1"],
                      params["beta1"], params["mean1"], params["var1"])
    w2, b2 = _fold_bn(params["w2"], params["b2"], params["gamma2"],
                      params["beta2"], params["mean2"], params["var2"])

    # Combined conv1+skip weight (K1, Mid_p + Cout_p):
    #   left  block: w1 flattened (dy, dx, cin)-major, BN1 folded, Mid padded;
    #   right block: zeros except the center-tap rows, which carry ws — the 1x1
    #                skip conv reads exactly the center pixel of each patch.
    w1f = jnp.pad(w1.reshape(K1, Mid), ((0, 0), (0, Mid_p - Mid)))
    ws_blk = jnp.zeros((K1, Cout_p), jnp.float32)
    ws_blk = ws_blk.at[4 * Cin:5 * Cin, :Cout].set(params["ws"])
    wc = jnp.concatenate([w1f, ws_blk], axis=1).astype(jnp.bfloat16)
    # Combined bias: [BN1-folded b1 | bs + BN2-folded b2]  (b2 rides on the
    # skip half since conv2 output and skip are summed anyway).
    bc = jnp.concatenate([jnp.pad(b1, (0, Mid_p - Mid)),
                          jnp.pad(params["bs"] + b2, (0, Cout_p - Cout))])
    bc = bc.reshape(1, MC).astype(jnp.float32)
    # conv2 weight: (3, 3*Mid_p, Cout_p), (dx, mid-channel) flattened to match
    # the kernel's dx-im2col (col3) layout.
    w2f = jnp.pad(w2, ((0, 0), (0, 0), (0, Mid_p - Mid), (0, Cout_p - Cout))
                  ).reshape(3, 3 * Mid_p, Cout_p).astype(jnp.bfloat16)

    # Row-block size derived from an explicit per-step VMEM budget.
    TH = _choose_row_block(N, H, W, Cin, Mid_p, Cout_p)
    RB = H // TH

    # Host-side conv1 im2col (K = 9*Cin) + halo'd overlapping row blocks, so
    # the kernel sees lane-friendly Blocked tiles and does one big matmul for
    # conv1+skip instead of 9 K=Cin accumulate matmuls.
    # TODO(synk): for large Cin the 9x patch inflation becomes HBM-wasteful —
    # switch conv1 back to per-tap accumulate matmuls there (K=Cin is then
    # MXU-friendly) instead of the host-side im2col.
    x = jnp.transpose(x_nchw, (0, 2, 3, 1)).astype(jnp.bfloat16)          # NHWC
    xp = jnp.pad(x, ((0, 0), (1, 1), (1, 1), (0, 0)))                     # spatial pad
    patches = jnp.concatenate(
        [xp[:, dy:dy + H, dx:dx + W, :] for dy in range(3) for dx in range(3)],
        axis=-1)                                                          # (N,H,W,K1)
    patches = jnp.pad(patches, ((0, 0), (1, 1), (0, 0), (0, 0)))          # mid-halo rows
    pblocks = jnp.stack([patches[:, rb * TH:rb * TH + TH + 2]
                         for rb in range(RB)], axis=1)                    # (N,RB,TH+2,W,K1)
    pblocks = pblocks.reshape(N * RB, TH + 2, W, K1)

    vmem_limit = int(min(48 * 1024 * 1024,
                         max(16 * 1024 * 1024,
                             2 * _vmem_estimate(TH, W, Cin, Mid_p, Cout_p))))

    out_nhwc = pl.pallas_call(
        _double_res_conv_kernel,
        out_shape=jax.ShapeDtypeStruct((N, H, W, Cout_p), jnp.bfloat16),
        grid_spec=pltpu.PrefetchScalarGridSpec(
            num_scalar_prefetch=0,
            grid=(N, RB),
            in_specs=[
                pl.BlockSpec((1, TH + 2, W, K1),
                             lambda n, r: (n * RB + r, 0, 0, 0)),
                pl.BlockSpec((K1, MC), lambda n, r: (0, 0)),
                pl.BlockSpec((1, MC), lambda n, r: (0, 0)),
                pl.BlockSpec((3, 3 * Mid_p, Cout_p), lambda n, r: (0, 0, 0)),
            ],
            out_specs=pl.BlockSpec((1, TH, W, Cout_p),
                                   lambda n, r: (n, r, 0, 0)),
            scratch_shapes=[
                pltpu.VMEM((TH + 2, W + 2, Mid_p), jnp.bfloat16),
                pltpu.VMEM((TH + 2, W, 3 * Mid_p), jnp.bfloat16),
            ]),
        compiler_params=pltpu.CompilerParams(
            dimension_semantics=("parallel", "parallel"),
            vmem_limit_bytes=vmem_limit),
    )(pblocks, wc, bc, w2f)

    # Drop channel padding, NHWC -> NCHW, back to f32 (PyTorch convention).
    return jnp.transpose(out_nhwc[..., :Cout], (0, 3, 1, 2)).astype(jnp.float32)


# ----------------------------------------------------------------------------
# Pure-JAX f32 reference (lax.conv) for correctness checking.
# ----------------------------------------------------------------------------
def _reference(x_nchw, params):
    x = jnp.transpose(x_nchw, (0, 2, 3, 1)).astype(jnp.float32)  # NHWC

    def conv(inp, w, b, pad):
        y = jax.lax.conv_general_dilated(
            inp, w, window_strides=(1, 1),
            padding=[(pad, pad), (pad, pad)],
            dimension_numbers=("NHWC", "HWIO", "NHWC"))
        return y + b

    def bn(y, gamma, beta, mean, var):
        return (y - mean) / jnp.sqrt(var + BN_EPS) * gamma + beta

    h = conv(x, params["w1"], params["b1"], 1)
    h = bn(h, params["gamma1"], params["beta1"], params["mean1"], params["var1"])
    h = jnp.maximum(h, 0.0)
    h = conv(h, params["w2"], params["b2"], 1)
    h = bn(h, params["gamma2"], params["beta2"], params["mean2"], params["var2"])
    skip = conv(x, params["ws"][None, None], params["bs"], 0)
    out = jnp.maximum(h + skip, 0.0)
    return jnp.transpose(out, (0, 3, 1, 2))


# ----------------------------------------------------------------------------
def make_params(key, in_ch, out_ch, mid_ch=None):
    mid_ch = out_ch if mid_ch is None else mid_ch
    ks = jax.random.split(key, 6)
    return {
        # conv weights stored HWIO (kh, kw, Cin, Cout)
        "w1": jax.random.normal(ks[0], (3, 3, in_ch, mid_ch), jnp.float32) * 0.1,
        "b1": jax.random.normal(ks[1], (mid_ch,), jnp.float32) * 0.1,
        "w2": jax.random.normal(ks[2], (3, 3, mid_ch, out_ch), jnp.float32) * 0.1,
        "b2": jax.random.normal(ks[3], (out_ch,), jnp.float32) * 0.1,
        "ws": jax.random.normal(ks[4], (in_ch, out_ch), jnp.float32) * 0.1,
        "bs": jax.random.normal(ks[5], (out_ch,), jnp.float32) * 0.1,
        # BatchNorm (eval mode) params — PyTorch default init
        # TODO(synk): training-mode BatchNorm (batch statistics) not implemented.
        "gamma1": jnp.ones((mid_ch,), jnp.float32),
        "beta1": jnp.zeros((mid_ch,), jnp.float32),
        "mean1": jnp.zeros((mid_ch,), jnp.float32),
        "var1": jnp.ones((mid_ch,), jnp.float32),
        "gamma2": jnp.ones((out_ch,), jnp.float32),
        "beta2": jnp.zeros((out_ch,), jnp.float32),
        "mean2": jnp.zeros((out_ch,), jnp.float32),
        "var2": jnp.ones((out_ch,), jnp.float32),
    }


if __name__ == "__main__":
    key = jax.random.PRNGKey(0)
    k_x, k_p = jax.random.split(key)

    N, C_IN, C_OUT, H, W = 2, 4, 8, 16, 16
    x = jax.random.normal(k_x, (N, C_IN, H, W), jnp.float32)   # NCHW, like PyTorch
    params = make_params(k_p, C_IN, C_OUT)

    out = jax.block_until_ready(double_res_conv(x, params))
    ref = jax.block_until_ready(_reference(x, params))

    assert out.shape == (N, C_OUT, H, W), out.shape
    max_err = float(jnp.max(jnp.abs(out - ref)))
    # bf16 matmul operands + bf16 output store vs f32 reference -> loosened tol.
    assert jnp.allclose(out, ref, atol=4e-2, rtol=4e-2), max_err
    print("KERNEL_OK")
</pallas_src>

<mosaic_0001>
module attributes {stable_mosaic.version = 11 : i64} {
  func.func @_double_res_conv_kernel(%arg0: i32, %arg1: i32, %arg2: memref<1x10x16x36xbf16, #tpu.memory_space<vmem>>, %arg3: memref<36x256xbf16, #tpu.memory_space<vmem>>, %arg4: memref<1x256xf32, #tpu.memory_space<vmem>>, %arg5: memref<3x384x128xbf16, #tpu.memory_space<vmem>>, %arg6: memref<1x8x16x128xbf16, #tpu.memory_space<vmem>>, %arg7: memref<10x18x128xbf16, #tpu.memory_space<vmem>>, %arg8: memref<10x16x384xbf16, #tpu.memory_space<vmem>>) attributes {dimension_semantics = [#tpu.dimension_semantics<parallel>, #tpu.dimension_semantics<parallel>], iteration_bounds = array<i64: 2, 2>, scalar_prefetch = 0 : i64, scratch_operands = 2 : i64, tpu.core_type = #tpu.core_type<tc>, window_params = [{transform_indices = @transform_0, window_bounds = array<i64: 1, 10, 16, 36>}, {pipeline_mode = #tpu.pipeline_mode<synchronous>, transform_indices = @transform_1, window_bounds = array<i64: 36, 256>}, {pipeline_mode = #tpu.pipeline_mode<synchronous>, transform_indices = @transform_2, window_bounds = array<i64: 1, 256>}, {pipeline_mode = #tpu.pipeline_mode<synchronous>, transform_indices = @transform_3, window_bounds = array<i64: 3, 384, 128>}, {transform_indices = @transform_4, window_bounds = array<i64: 1, 8, 16, 128>}]} {
    %c0 = arith.constant 0 : index
    %c0_0 = arith.constant 0 : index
    %c0_1 = arith.constant 0 : index
    %c0_2 = arith.constant 0 : index
    %0 = vector.load %arg2[%c0, %c0_0, %c0_1, %c0_2] : memref<1x10x16x36xbf16, #tpu.memory_space<vmem>>, vector<1x10x16x36xbf16>
    %1 = vector.shape_cast %0 : vector<1x10x16x36xbf16> to vector<160x36xbf16>
    %c0_3 = arith.constant 0 : index
    %c0_4 = arith.constant 0 : index
    %2 = vector.load %arg3[%c0_3, %c0_4] : memref<36x256xbf16, #tpu.memory_space<vmem>>, vector<36x256xbf16>
    %cst = arith.constant dense<0.000000e+00> : vector<160x256xf32>
    %3 = tpu.matmul %1, %2, %cst {dimension_numbers = #tpu.dot_dimension_numbers<[1], [0], [0], [1], [0, 0, 1, 1], [], []>} : vector<160x36xbf16>, vector<36x256xbf16>, vector<160x256xf32> -> vector<160x256xf32>
    %c0_5 = arith.constant 0 : index
    %c0_6 = arith.constant 0 : index
    %4 = vector.load %arg4[%c0_5, %c0_6] : memref<1x256xf32, #tpu.memory_space<vmem>>, vector<1x256xf32>
    %5 = vector.broadcast %4 : vector<1x256xf32> to vector<160x256xf32>
    %6 = arith.addf %3, %5 : vector<160x256xf32>
    %7 = vector.extract_strided_slice %6 {offsets = [0, 0], sizes = [160, 128], strides = [1, 1]} : vector<160x256xf32> to vector<160x128xf32>
    %cst_7 = arith.constant 0.000000e+00 : f32
    %8 = vector.broadcast %cst_7 : f32 to vector<160x128xf32>
    %9 = arith.maximumf %7, %8 : vector<160x128xf32>
    %10 = arith.truncf %9 : vector<160x128xf32> to vector<160x128xbf16>
    %11 = vector.shape_cast %10 : vector<160x128xbf16> to vector<10x16x128xbf16>
    %12 = vector.shape_cast %6 : vector<160x256xf32> to vector<10x16x256xf32>
    %13 = vector.extract_strided_slice %12 {offsets = [1, 0, 128], sizes = [8, 16, 128], strides = [1, 1, 1]} : vector<10x16x256xf32> to vector<8x16x128xf32>
    %14 = vector.shape_cast %13 : vector<8x16x128xf32> to vector<128x128xf32>
    %c0_8 = arith.constant 0 : index
    %c1 = arith.constant 1 : index
    %c0_9 = arith.constant 0 : index
    %15 = vector.load %arg7[%c0_8, %c1, %c0_9] : memref<10x18x128xbf16, #tpu.memory_space<vmem>>, vector<10x16x128xbf16>
    tpu.vector_store %arg7[%c0_8, %c1, %c0_9], %11 {strides = array<i32>} : memref<10x18x128xbf16, #tpu.memory_space<vmem>>, vector<10x16x128xbf16>,
    %cst_10 = arith.constant 0.000000e+00 : bf16
    %16 = vector.broadcast %cst_10 : bf16 to vector<10x1x128xbf16>
    %c0_11 = arith.constant 0 : index
    %c0_12 = arith.constant 0 : index
    %c0_13 = arith.constant 0 : index
    %17 = vector.load %arg7[%c0_11, %c0_12, %c0_13] : memref<10x18x128xbf16, #tpu.memory_space<vmem>>, vector<10x1x128xbf16>
    tpu.vector_store %arg7[%c0_11, %c0_12, %c0_13], %16 {strides = array<i32>} : memref<10x18x128xbf16, #tpu.memory_space<vmem>>, vector<10x1x128xbf16>,
    %c0_14 = arith.constant 0 : index
    %c17 = arith.constant 17 : index
    %c0_15 = arith.constant 0 : index
    %18 = vector.load %arg7[%c0_14, %c17, %c0_15] : memref<10x18x128xbf16, #tpu.memory_space<vmem>>, vector<10x1x128xbf16>
    tpu.vector_store %arg7[%c0_14, %c17, %c0_15], %16 {strides = array<i32>} : memref<10x18x128xbf16, #tpu.memory_space<vmem>>, vector<10x1x128xbf16>,
    %cst_16 = arith.constant 0.000000e+00 : bf16
    %19 = vector.broadcast %cst_16 : bf16 to vector<1x18x128xbf16>
    %c0_i32 = arith.constant 0 : i32
    %20 = arith.cmpi eq, %arg1, %c0_i32 : i32
    %21 = arith.extui %20 : i1 to i32
    %c0_i32_17 = arith.constant 0 : i32
    %22 = arith.cmpi ne, %21, %c0_i32_17 : i32
    scf.if %22 {
      %c0_60 = arith.constant 0 : index
      %c0_61 = arith.constant 0 : index
      %c0_62 = arith.constant 0 : index
      %55 = vector.load %arg7[%c0_60, %c0_61, %c0_62] : memref<10x18x128xbf16, #tpu.memory_space<vmem>>, vector<1x18x128xbf16>
      tpu.vector_store %arg7[%c0_60, %c0_61, %c0_62], %19 {strides = array<i32>} : memref<10x18x128xbf16, #tpu.memory_space<vmem>>, vector<1x18x128xbf16>,
    } else {
    }
    %c1_i32 = arith.constant 1 : i32
    %23 = arith.cmpi eq, %arg1, %c1_i32 : i32
    %24 = arith.extui %23 : i1 to i32
    %c0_i32_18 = arith.constant 0 : i32
    %25 = arith.cmpi ne, %24, %c0_i32_18 : i32
    scf.if %25 {
      %c9 = arith.constant 9 : index
      %c0_60 = arith.constant 0 : index
      %c0_61 = arith.constant 0 : index
      %55 = vector.load %arg7[%c9, %c0_60, %c0_61] : memref<10x18x128xbf16, #tpu.memory_space<vmem>>, vector<1x18x128xbf16>
      tpu.vector_store %arg7[%c9, %c0_60, %c0_61], %19 {strides = array<i32>} : memref<10x18x128xbf16, #tpu.memory_space<vmem>>, vector<1x18x128xbf16>,
    } else {
    }
    %c0_19 = arith.constant 0 : index
    %c0_20 = arith.constant 0 : index
    %c0_21 = arith.constant 0 : index
    %26 = vector.load %arg7[%c0_19, %c0_20, %c0_21] : memref<10x18x128xbf16, #tpu.memory_space<vmem>>, vector<10x16x128xbf16>
    %c0_22 = arith.constant 0 : index
    %c0_23 = arith.constant 0 : index
    %c0_24 = arith.constant 0 : index
    %27 = vector.load %arg8[%c0_22, %c0_23, %c0_24] : memref<10x16x384xbf16, #tpu.memory_space<vmem>>, vector<10x16x128xbf16>
    tpu.vector_store %arg8[%c0_22, %c0_23, %c0_24], %26 {strides = array<i32>} : memref<10x16x384xbf16, #tpu.memory_space<vmem>>, vector<10x16x128xbf16>,
    %c0_25 = arith.constant 0 : index
    %c1_26 = arith.constant 1 : index
    %c0_27 = arith.constant 0 : index
    %28 = vector.load %arg7[%c0_25, %c1_26, %c0_27] : memref<10x18x128xbf16, #tpu.memory_space<vmem>>, vector<10x16x128xbf16>
    %c0_28 = arith.constant 0 : index
    %c0_29 = arith.constant 0 : index
    %c128 = arith.constant 128 : index
    %29 = vector.load %arg8[%c0_28, %c0_29, %c128] : memref<10x16x384xbf16, #tpu.memory_space<vmem>>, vector<10x16x128xbf16>
    tpu.vector_store %arg8[%c0_28, %c0_29, %c128], %28 {strides = array<i32>} : memref<10x16x384xbf16, #tpu.memory_space<vmem>>, vector<10x16x128xbf16>,
    %c0_30 = arith.constant 0 : index
    %c2 = arith.constant 2 : index
    %c0_31 = arith.constant 0 : index
    %30 = vector.load %arg7[%c0_30, %c2, %c0_31] : memref<10x18x128xbf16, #tpu.memory_space<vmem>>, vector<10x16x128xbf16>
    %c0_32 = arith.constant 0 : index
    %c0_33 = arith.constant 0 : index
    %c256 = arith.constant 256 : index
    %31 = vector.load %arg8[%c0_32, %c0_33, %c256] : memref<10x16x384xbf16, #tpu.memory_space<vmem>>, vector<10x16x128xbf16>
    tpu.vector_store %arg8[%c0_32, %c0_33, %c256], %30 {strides = array<i32>} : memref<10x16x384xbf16, #tpu.memory_space<vmem>>, vector<10x16x128xbf16>,
    %c0_34 = arith.constant 0 : index
    %c0_35 = arith.constant 0 : index
    %c0_36 = arith.constant 0 : index
    %32 = vector.load %arg8[%c0_34, %c0_35, %c0_36] : memref<10x16x384xbf16, #tpu.memory_space<vmem>>, vector<8x16x384xbf16>
    %33 = vector.shape_cast %32 : vector<8x16x384xbf16> to vector<128x384xbf16>
    %c0_37 = arith.constant 0 : index
    %c0_38 = arith.constant 0 : index
    %c0_39 = arith.constant 0 : index
    %34 = vector.load %arg5[%c0_37, %c0_38, %c0_39] : memref<3x384x128xbf16, #tpu.memory_space<vmem>>, vector<1x384x128xbf16>
    %35 = vector.shape_cast %34 : vector<1x384x128xbf16> to vector<384x128xbf16>
    %cst_40 = arith.constant dense<0.000000e+00> : vector<128x128xf32>
    %36 = tpu.matmul %33, %35, %cst_40 {dimension_numbers = #tpu.dot_dimension_numbers<[1], [0], [0], [1], [0, 0, 1, 1], [], []>} : vector<128x384xbf16>, vector<384x128xbf16>, vector<128x128xf32> -> vector<128x128xf32>
    %37 = arith.addf %14, %36 : vector<128x128xf32>
    %c1_41 = arith.constant 1 : index
    %c0_42 = arith.constant 0 : index
    %c0_43 = arith.constant 0 : index
    %38 = vector.load %arg8[%c1_41, %c0_42, %c0_43] : memref<10x16x384xbf16, #tpu.memory_space<vmem>>, vector<8x16x384xbf16>
    %39 = vector.shape_cast %38 : vector<8x16x384xbf16> to vector<128x384xbf16>
    %c1_44 = arith.constant 1 : index
    %c0_45 = arith.constant 0 : index
    %c0_46 = arith.constant 0 : index
    %40 = vector.load %arg5[%c1_44, %c0_45, %c0_46] : memref<3x384x128xbf16, #tpu.memory_space<vmem>>, vector<1x384x128xbf16>
    %41 = vector.shape_cast %40 : vector<1x384x128xbf16> to vector<384x128xbf16>
    %cst_47 = arith.constant dense<0.000000e+00> : vector<128x128xf32>
    %42 = tpu.matmul %39, %41, %cst_47 {dimension_numbers = #tpu.dot_dimension_numbers<[1], [0], [0], [1], [0, 0, 1, 1], [], []>} : vector<128x384xbf16>, vector<384x128xbf16>, vector<128x128xf32> -> vector<128x128xf32>
    %43 = arith.addf %37, %42 : vector<128x128xf32>
    %c2_48 = arith.constant 2 : index
    %c0_49 = arith.constant 0 : index
    %c0_50 = arith.constant 0 : index
    %44 = vector.load %arg8[%c2_48, %c0_49, %c0_50] : memref<10x16x384xbf16, #tpu.memory_space<vmem>>, vector<8x16x384xbf16>
    %45 = vector.shape_cast %44 : vector<8x16x384xbf16> to vector<128x384xbf16>
    %c2_51 = arith.constant 2 : index
    %c0_52 = arith.constant 0 : index
    %c0_53 = arith.constant 0 : index
    %46 = vector.load %arg5[%c2_51, %c0_52, %c0_53] : memref<3x384x128xbf16, #tpu.memory_space<vmem>>, vector<1x384x128xbf16>
    %47 = vector.shape_cast %46 : vector<1x384x128xbf16> to vector<384x128xbf16>
    %cst_54 = arith.constant dense<0.000000e+00> : vector<128x128xf32>
    %48 = tpu.matmul %45, %47, %cst_54 {dimension_numbers = #tpu.dot_dimension_numbers<[1], [0], [0], [1], [0, 0, 1, 1], [], []>} : vector<128x384xbf16>, vector<384x128xbf16>, vector<128x128xf32> -> vector<128x128xf32>
    %49 = arith.addf %43, %48 : vector<128x128xf32>
    %cst_55 = arith.constant 0.000000e+00 : f32
    %50 = vector.broadcast %cst_55 : f32 to vector<128x128xf32>
    %51 = arith.maximumf %49, %50 : vector<128x128xf32>
    %52 = vector.shape_cast %51 : vector<128x128xf32> to vector<1x8x16x128xf32>
    %53 = arith.truncf %52 : vector<1x8x16x128xf32> to vector<1x8x16x128xbf16>
    %c0_56 = arith.constant 0 : index
    %c0_57 = arith.constant 0 : index
    %c0_58 = arith.constant 0 : index
    %c0_59 = arith.constant 0 : index
    %54 = vector.load %arg6[%c0_56, %c0_57, %c0_58, %c0_59] : memref<1x8x16x128xbf16, #tpu.memory_space<vmem>>, vector<1x8x16x128xbf16>
    tpu.vector_store %arg6[%c0_56, %c0_57, %c0_58, %c0_59], %53 {strides = array<i32>} : memref<1x8x16x128xbf16, #tpu.memory_space<vmem>>, vector<1x8x16x128xbf16>,
    return
  }
  func.func @transform_0(%arg0: i32, %arg1: i32) -> (i32, i32, i32, i32) {
    %c2_i32 = arith.constant 2 : i32
    %0 = arith.muli %arg0, %c2_i32 : i32
    %1 = arith.addi %0, %arg1 : i32
    %c0_i32 = arith.constant 0 : i32
    %c0_i32_0 = arith.constant 0 : i32
    %c0_i32_1 = arith.constant 0 : i32
    %c0_i32_2 = arith.constant 0 : i32
    return %1, %c0_i32, %c0_i32_0, %c0_i32_1 : i32, i32, i32, i32
  }
  func.func @transform_1(%arg0: i32, %arg1: i32) -> (i32, i32) {
    %c0_i32 = arith.constant 0 : i32
    %c0_i32_0 = arith.constant 0 : i32
    %c0_i32_1 = arith.constant 0 : i32
    return %c0_i32, %c0_i32_0 : i32, i32
  }
  func.func @transform_2(%arg0: i32, %arg1: i32) -> (i32, i32) {
    %c0_i32 = arith.constant 0 : i32
    %c0_i32_0 = arith.constant 0 : i32
    %c0_i32_1 = arith.constant 0 : i32
    return %c0_i32, %c0_i32_0 : i32, i32
  }
  func.func @transform_3(%arg0: i32, %arg1: i32) -> (i32, i32, i32) {
    %c0_i32 = arith.constant 0 : i32
    %c0_i32_0 = arith.constant 0 : i32
    %c0_i32_1 = arith.constant 0 : i32
    %c0_i32_2 = arith.constant 0 : i32
    return %c0_i32, %c0_i32_0, %c0_i32_1 : i32, i32, i32
  }
  func.func @transform_4(%arg0: i32, %arg1: i32) -> (i32, i32, i32, i32) {
    %c0_i32 = arith.constant 0 : i32
    %c0_i32_0 = arith.constant 0 : i32
    %c0_i32_1 = arith.constant 0 : i32
    return %arg0, %arg1, %c0_i32, %c0_i32_0 : i32, i32, i32, i32
  }
}

</mosaic_0001>

<llo_original>
// kernel: tpu_custom_call.1
$region0: #{tpu_custom_call.1}
  #allocation0 [shape = 'u32[]', space=smem, size = 0x4, offset = 0x4, fixed_abs, tag = 'smem constant byte address 0x4 - core index']
  #allocation1 [shape = 'u32[144,128]{1,0:T(1,128)}', space=vmem, size = 0x12000, scoped, tag = 'internal scratch']
  #allocation2 [shape = 'bf16[10,18,128]{2,1,0:T(8,128)(2,1)}', space=vmem, size = 0xf000, scoped, tag = 'scratch operand']
  #allocation3 [shape = 'bf16[10,16,384]{2,1,0:T(16,128)(2,1)}', space=vmem, size = 0x1e000, scoped, tag = 'scratch operand']
  %s0 = inlined_call_operand.hbm [shape: bf16[4,10,16,36], index: 0, kind: input, shape index: {}]
  %s1 = inlined_call_operand.hbm [shape: bf16[36,256], index: 1, kind: input, shape index: {}]
  %s2 = inlined_call_operand.vmem [shape: f32[1,256], index: 2, kind: input, shape index: {}]
  %s3 = inlined_call_operand.hbm [shape: bf16[3,384,128], index: 3, kind: input, shape index: {}]
  %s4 = inlined_call_operand.hbm [shape: bf16[2,16,16,128], index: 4, kind: output, shape index: {}]
  %s5 = sld [smem:[#allocation0]]
  $region69: #{tpu_custom_call.1} parent=0
    _
  %s7 = ssub.s32 1, %s5
  %s8 = scalar_select 0, %s7, %s5
  $region1: #{tpu_custom_call.1} parent=0
    #allocation4 [shape = 'u8[81920]{0}', space=vmem, size = 0x14000, scoped, tag = 'input window, operand 0']
    #allocation5 [shape = 's32[2]{0}', space=sflag, size = 0x8, scoped, tag = 'scoped memory for tpu_custom_call.1']
    #allocation6 [shape = 's32[2]{0}', space=sflag, size = 0x8, scoped, tag = 'scoped memory for tpu_custom_call.1']
    #allocation7 [shape = 'u8[20480]{0}', space=vmem, size = 0x5000, scoped, tag = 'input window, operand 1, single buffered']
    #allocation8 [shape = 's32[1]{0}', space=sflag, size = 0x4, scoped, tag = 'scoped memory for tpu_custom_call.1']
    #allocation9 [shape = 'u8[294912]{0}', space=vmem, size = 0x48000, scoped, tag = 'input window, operand 3, single buffered']
    #allocation10 [shape = 'u8[65536]{0}', space=vmem, size = 0x10000, scoped, tag = 'output window, operand 0']
    %9 = vsyncpa [#allocation5], 0
    %s10 = scalar_lea.sflag [#allocation5], 1
    %11 = vsyncpa %s10, 0
    %12 = vsyncpa [#allocation8], 0
    %13 = vsyncpa [#allocation6], 0
    %s14 = scalar_lea.sflag [#allocation6], 1
    %15 = vsyncpa %s14, 0
    loop: start=0, step=1, limit=6
    $region2: #{tpu_custom_call.1} parent=1 // loop_pre_header
      _
    $region3: #{tpu_custom_call.1} parent=1 // loop_header
      %s17 = sphi 0, %s21
      %p18 = scmp.ge.s32.totalorder %s17, 6
      %s24 = sphi 0, %s36
      %s25 = sphi 0, %s32
      %s26 = sphi 0, %s24
      %s27 = sphi 0, %s25
      %s28 = sphi 0, %s26
      %s29 = sphi 0, %s27
      %s43 = sphi 0, %s45
      %s46 = sphi 0, %s43
      %s47 = sphi 0, %s46
      %s63 = sphi 0, %s47
      %s67 = sphi 0, %s67
      %s69 = sphi 0, %s67
      %s70 = sphi 0, %s69
      %s84 = sphi 0, %s70
      %s88 = sphi 0, %s88
      %s90 = sphi 0, %s88
      %s91 = sphi 0, %s90
      %s105 = sphi 0, %s91
      %s109 = sphi 0, %s109
      %s111 = sphi 0, %s109
      %s112 = sphi 0, %s111
      %s126 = sphi 0, %s112
      %s134 = sphi 0, %s136
      %s137 = sphi 0, %s134
      %s138 = sphi 0, %s137
      %s154 = sphi 0, %s138
    $region4: #{tpu_custom_call.1} parent=1 // loop_header_branch
      %20 = sbr.rel (%p18) target = $region8
    $region5: #{tpu_custom_call.1} parent=1 // loop_body
      %s22 = ssub.s32 %s17, 1
      %s23 = ssub.s32 %s17, 2
      %s30 = sadd.s32 1, %s25
      %p31 = scmp.ge.s32.totalorder %s30, 2
      %s32 = scalar_select %p31, 0, %s30
      %s33 = sadd.s32 1, %s24
      %s34 = scalar_select %p31, %s33, %s24
      %p35 = scmp.ge.s32.totalorder %s34, 2
      %s36 = scalar_select %p35, 0, %s34
      %s37 = smul.u32 %s24, 2
      %s38 = sadd.s32 %s37, %s25
      %s39 = smul.u32 %s36, 2
      %s40 = sadd.s32 %s39, %s32
      %s41 = ssub.s32 %s38, %s40
      %p42 = scmp.eq.s32.totalorder %s41, 0
      %s44 = sadd.s32 %s43, 1
      %s45 = scalar_select %p42, %s43, %s44
      %p48 = pneg %p42
      %p49 = scmp.eq.s32.totalorder %s17, 3
      %p50 = por %p48, %p49
      %p51 = scmp.ne.s32.totalorder %s43, %s46
      %p52 = scmp.eq.s32.totalorder %s17, 0
      %p53 = por %p51, %p52
      %p54 = scmp.ne.s32.totalorder %s43, %s46
      %p55 = scmp.eq.s32.totalorder %s22, 3
      %p56 = por %p54, %p55
      %p57 = scmp.ne.s32.totalorder %s46, %s47
      %p58 = scmp.eq.s32.totalorder %s22, 0
      %p59 = por %p57, %p58
      %p60 = scmp.ne.s32.totalorder %s46, %s47
      %p61 = scmp.eq.s32.totalorder %s23, 3
      %p62 = por %p60, %p61
      %p64 = scmp.ne.s32.totalorder %s47, %s63
      %p65 = scmp.eq.s32.totalorder %s23, 0
      %p66 = por %p64, %p65
      %s68 = sadd.s32 %s67, 1
      %p71 = scmp.eq.s32.totalorder %s17, 3
      %p72 = scmp.ne.s32.totalorder %s67, %s69
      %p73 = scmp.eq.s32.totalorder %s17, 0
      %p74 = por %p72, %p73
      %p75 = scmp.ne.s32.totalorder %s67, %s69
      %p76 = scmp.eq.s32.totalorder %s22, 3
      %p77 = por %p75, %p76
      %p78 = scmp.ne.s32.totalorder %s69, %s70
      %p79 = scmp.eq.s32.totalorder %s22, 0
      %p80 = por %p78, %p79
      %p81 = scmp.ne.s32.totalorder %s69, %s70
      %p82 = scmp.eq.s32.totalorder %s23, 3
      %p83 = por %p81, %p82
      %p85 = scmp.ne.s32.totalorder %s70, %s84
      %p86 = scmp.eq.s32.totalorder %s23, 0
      %p87 = por %p85, %p86
      %s89 = sadd.s32 %s88, 1
      %p92 = scmp.eq.s32.totalorder %s17, 3
      %p93 = scmp.ne.s32.totalorder %s88, %s90
      %p94 = scmp.eq.s32.totalorder %s17, 0
      %p95 = por %p93, %p94
      %p96 = scmp.ne.s32.totalorder %s88, %s90
      %p97 = scmp.eq.s32.totalorder %s22, 3
      %p98 = por %p96, %p97
      %p99 = scmp.ne.s32.totalorder %s90, %s91
      %p100 = scmp.eq.s32.totalorder %s22, 0
      %p101 = por %p99, %p100
      %p102 = scmp.ne.s32.totalorder %s90, %s91
      %p103 = scmp.eq.s32.totalorder %s23, 3
      %p104 = por %p102, %p103
      %p106 = scmp.ne.s32.totalorder %s91, %s105
      %p107 = scmp.eq.s32.totalorder %s23, 0
      %p108 = por %p106, %p107
      %s110 = sadd.s32 %s109, 1
      %p113 = scmp.eq.s32.totalorder %s17, 3
      %p114 = scmp.ne.s32.totalorder %s109, %s111
      %p115 = scmp.eq.s32.totalorder %s17, 0
      %p116 = por %p114, %p115
      %p117 = scmp.ne.s32.totalorder %s109, %s111
      %p118 = scmp.eq.s32.totalorder %s22, 3
      %p119 = por %p117, %p118
      %p120 = scmp.ne.s32.totalorder %s111, %s112
      %p121 = scmp.eq.s32.totalorder %s22, 0
      %p122 = por %p120, %p121
      %p123 = scmp.ne.s32.totalorder %s111, %s112
      %p124 = scmp.eq.s32.totalorder %s23, 3
      %p125 = por %p123, %p124
      %p127 = scmp.ne.s32.totalorder %s112, %s126
      %p128 = scmp.eq.s32.totalorder %s23, 0
      %p129 = por %p127, %p128
      %s130 = ssub.s32 %s24, %s36
      %s131 = ssub.s32 %s25, %s32
      %s132 = sor.u32 %s130, %s131
      %p133 = scmp.eq.s32.totalorder %s132, 0
      %s135 = sadd.s32 %s134, 1
      %s136 = scalar_select %p133, %s134, %s135
      %p139 = pneg %p133
      %p140 = scmp.eq.s32.totalorder %s17, 3
      %p141 = por %p139, %p140
      %p142 = scmp.ne.s32.totalorder %s134, %s137
      %p143 = scmp.eq.s32.totalorder %s17, 0
      %p144 = por %p142, %p143
      %p145 = scmp.ne.s32.totalorder %s134, %s137
      %p146 = scmp.eq.s32.totalorder %s22, 3
      %p147 = por %p145, %p146
      %p148 = scmp.ne.s32.totalorder %s137, %s138
      %p149 = scmp.eq.s32.totalorder %s22, 0
      %p150 = por %p148, %p149
      %p151 = scmp.ne.s32.totalorder %s137, %s138
      %p152 = scmp.eq.s32.totalorder %s23, 3
      %p153 = por %p151, %p152
      %p155 = scmp.ne.s32.totalorder %s138, %s154
      %p156 = scmp.eq.s32.totalorder %s23, 0
      %p157 = por %p155, %p156
      %p158 = scmp.le.s32.totalorder 1, %s17
      %p159 = scmp.lt.s32.totalorder %s17, 5
      %p160 = pnand %p158, %p159
      %p161 = pneg %p160
      // Predicated region
      $region9: #{tpu_custom_call.1} parent=5 // pred_check
        _
      $region10: #{tpu_custom_call.1} parent=5 // pred_check_branch
        %163 = sbr.rel (%p160) target = $region12
      $region11: #{tpu_custom_call.1} parent=5 // pred_region
        %s164 = ssub.s32 %s17, 1
        // Predicated region
        $region13: #{tpu_custom_call.1} parent=11 // pred_check
          %p165 = pneg %p80
        $region14: #{tpu_custom_call.1} parent=11 // pred_check_branch
          %167 = sbr.rel (%p165) target = $region16
        $region15: #{tpu_custom_call.1} parent=11 // pred_region
          %s169 = ssub.s32 640, 640
          %170 = vsyncadd [#allocation8], %s169
          %s171 = sshll.u32 [#allocation7], 4
          %s172 = int_to_ptr.vmem [resolvable:$true] %s171
          %177 = dma.hbm_to_vmem [thread:$0]  %s1, 640, %s172, [#allocation8], 128, 128, 8
        $region16: #{tpu_custom_call.1} parent=11 // pred_fallthru
          _
        // Predicated region
        $region17: #{tpu_custom_call.1} parent=11 // pred_check
          %p178 = pneg %p101
        $region18: #{tpu_custom_call.1} parent=11 // pred_check_branch
          %180 = sbr.rel (%p178) target = $region20
        $region19: #{tpu_custom_call.1} parent=11 // pred_region
          _
        $region20: #{tpu_custom_call.1} parent=11 // pred_fallthru
          _
        // Predicated region
        $region21: #{tpu_custom_call.1} parent=11 // pred_check
          %p181 = pneg %p122
        $region22: #{tpu_custom_call.1} parent=11 // pred_check_branch
          %183 = sbr.rel (%p181) target = $region24
        $region23: #{tpu_custom_call.1} parent=11 // pred_region
          %s185 = ssub.s32 9216, 9216
          %186 = vsyncadd [#allocation8], %s185
          %s187 = sshll.u32 [#allocation9], 4
          %s188 = int_to_ptr.vmem [resolvable:$true] %s187
          %193 = dma.hbm_to_vmem [thread:$0]  %s3, 9216, %s188, [#allocation8], 64, 64, 4
        $region24: #{tpu_custom_call.1} parent=11 // pred_fallthru
          _
      $region12: #{tpu_custom_call.1} parent=5 // pred_fallthru
        _
      %p194 = scmp.lt.s32.totalorder %s17, 4
      // Predicated region
      $region25: #{tpu_custom_call.1} parent=5 // pred_check
        %p195 = pneg %p194
      $region26: #{tpu_custom_call.1} parent=5 // pred_check_branch
        %197 = sbr.rel (%p195) target = $region28
      $region27: #{tpu_custom_call.1} parent=5 // pred_region
        // Predicated region
        $region29: #{tpu_custom_call.1} parent=27 // pred_check
          %p198 = pneg %p53
        $region30: #{tpu_custom_call.1} parent=27 // pred_check_branch
          %200 = sbr.rel (%p198) target = $region32
        $region31: #{tpu_custom_call.1} parent=27 // pred_region
          %s201 = sand.u32 %s43, 1
          %s202 = scalar_lea.sflag [#allocation5], %s201
          %s203 = sand.u32 %s43, 1
          %s204 = smul.addr %s203, 80
          %s205 = scalar_lea.vmem [#allocation4], %s204
          %s206 = smul.u32 %s24, 2
          %s207 = sadd.s32 %s206, %s25
          %s209 = ssub.s32 1280, 1280
          %210 = vsyncadd %s202, %s209
          %s211 = smul.addr %s207, 20
          %s212 = smul.addr %s211, 64
          %s213 = scalar_lea.hbm %s0, %s212
          %s214 = sshll.u32 %s205, 4
          %s215 = int_to_ptr.vmem [resolvable:$true] %s214
          %220 = dma.hbm_to_vmem [thread:$0]  %s213, 1280, %s215, %s202, 64, 64, 4
        $region32: #{tpu_custom_call.1} parent=27 // pred_fallthru
          _
      $region28: #{tpu_custom_call.1} parent=5 // pred_fallthru
        _
      %p221 = scmp.le.s32.totalorder 1, %s17
      %p222 = scmp.lt.s32.totalorder %s17, 5
      %p223 = pnand %p221, %p222
      %p224 = pneg %p223
      // Predicated region
      $region33: #{tpu_custom_call.1} parent=5 // pred_check
        _
      $region34: #{tpu_custom_call.1} parent=5 // pred_check_branch
        %226 = sbr.rel (%p223) target = $region36
      $region35: #{tpu_custom_call.1} parent=5 // pred_region
        %s227 = ssub.s32 %s17, 1
        %s228 = sand.u32 %s46, 1
        %s229 = scalar_lea.sflag [#allocation5], %s228
        %s230 = sand.u32 %s46, 1
        %s231 = smul.addr %s230, 80
        %s232 = scalar_lea.vmem [#allocation4], %s231
        // Predicated region
        $region37: #{tpu_custom_call.1} parent=35 // pred_check
          %p233 = pneg %p59
        $region38: #{tpu_custom_call.1} parent=35 // pred_check_branch
          %235 = sbr.rel (%p233) target = $region40
        $region39: #{tpu_custom_call.1} parent=35 // pred_region
          %236 = dma.done %s229, 1280
        $region40: #{tpu_custom_call.1} parent=35 // pred_fallthru
          _
        // Predicated region
        $region41: #{tpu_custom_call.1} parent=35 // pred_check
          %p237 = pneg %p80
        $region42: #{tpu_custom_call.1} parent=35 // pred_check_branch
          %239 = sbr.rel (%p237) target = $region44
        $region43: #{tpu_custom_call.1} parent=35 // pred_region
          %240 = dma.done [#allocation8], 640
        $region44: #{tpu_custom_call.1} parent=35 // pred_fallthru
          _
        // Predicated region
        $region45: #{tpu_custom_call.1} parent=35 // pred_check
          %p241 = pneg %p122
        $region46: #{tpu_custom_call.1} parent=35 // pred_check_branch
          %243 = sbr.rel (%p241) target = $region48
        $region47: #{tpu_custom_call.1} parent=35 // pred_region
          %244 = dma.done [#allocation8], 9216
        $region48: #{tpu_custom_call.1} parent=35 // pred_fallthru
          _
        %s245 = sand.u32 %s46, 1
        %s246 = scalar_lea.sflag [#allocation5], %s245
        %s247 = sand.u32 %s46, 1
        %s248 = smul.addr %s247, 80
        %s249 = scalar_lea.vmem [#allocation4], %s248
        %p250 = pneg %p59
        %p251 = pneg %p56
        %p252 = pneg %p80
        %p253 = pneg %p77
        %p254 = pneg %p101
        %p255 = pneg %p98
        %p256 = pneg %p122
        %p257 = pneg %p119
        %p258 = pneg %p150
        %p259 = pneg %p147
        %s260 = sand.u32 %s137, 1
        %s261 = scalar_lea.sflag [#allocation6], %s260
        %s262 = sand.u32 %s137, 1
        %s263 = smul.addr %s262, 64
        %s264 = scalar_lea.vmem [#allocation10], %s263
        %s265 = smul.u32 %s26, 2
        %s266 = sadd.s32 %s265, %s27
        %s267 = smul.u32 8, %s27
        %v269 = vld [vmem:[%s232] sm:$0xf]
        %v270 = vld [vmem:[%s232 + $0x4] sm:$0xf]
        %v271 = vld [vmem:[%s232 + $0x8] sm:$0xf]
        %v272 = vld [vmem:[%s232 + $0xc] sm:$0xf]
        %v273 = vld [vmem:[%s232 + $0x10] sm:$0xf]
        %v274 = vld [vmem:[%s232 + $0x14] sm:$0xf]
        %v275 = vld [vmem:[%s232 + $0x18] sm:$0xf]
        %v276 = vld [vmem:[%s232 + $0x1c] sm:$0xf]
        %v277 = vld [vmem:[%s232 + $0x20] sm:$0xf]
        %v278 = vld [vmem:[%s232 + $0x24] sm:$0xf]
        %v279 = vld [vmem:[%s232 + $0x28] sm:$0xf]
        %v280 = vld [vmem:[%s232 + $0x2c] sm:$0xf]
        %v281 = vld [vmem:[%s232 + $0x30] sm:$0xf]
        %v282 = vld [vmem:[%s232 + $0x34] sm:$0xf]
        %v283 = vld [vmem:[%s232 + $0x38] sm:$0xf]
        %v284 = vld [vmem:[%s232 + $0x3c] sm:$0xf]
        %v285 = vld [vmem:[%s232 + $0x40] sm:$0xf]
        %v286 = vld [vmem:[%s232 + $0x44] sm:$0xf]
        %v287 = vld [vmem:[%s232 + $0x48] sm:$0xf]
        %v288 = vld [vmem:[%s232 + $0x4c] sm:$0xf]
        %v289 = vld [vmem:[#allocation7] sm:$0xff]
        %v290 = vld [vmem:[#allocation7 + $0x8] sm:$0xff]
        %v291 = vld [vmem:[#allocation7 + $0x10] sm:$0xff]
        %v292 = vld [vmem:[#allocation7 + $0x18] sm:$0xff]
        %v293 = vld [vmem:[#allocation7 + $0x20] sm:$0x33]
        %v294 = vld [vmem:[%s2] sm:$0x3]
        %v296 = vlaneseq
        %v297 = vshrl.u32 %v296, 7
        %v298 = vsub.s32 0, %v297
        %v299 = vrot.slane %v294, %v298
        %v300 = vlaneseq
        %v301 = vshrl.u32 %v300, 7
        %v302 = vsub.s32 1, %v301
        %v303 = vrot.slane %v294, %v302
        %v326 = vunpack.c.l.b16 %v269
        %v327 = vunpack.c.l.b16 %v270
        %v328 = vunpack.c.l.b16 %v271
        %v329 = vunpack.c.l.b16 %v272
        %v330 = vunpack.c.l.b16 %v273
        %v331 = vunpack.c.l.b16 %v274
        %v332 = vunpack.c.l.b16 %v275
        %v333 = vunpack.c.l.b16 %v276
        %v334 = vunpack.c.l.b16 %v277
        %v335 = vunpack.c.l.b16 %v278
        %v336 = vunpack.c.l.b16 %v279
        %v337 = vunpack.c.l.b16 %v280
        %v338 = vunpack.c.l.b16 %v281
        %v339 = vunpack.c.l.b16 %v282
        %v340 = vunpack.c.l.b16 %v283
        %v341 = vunpack.c.l.b16 %v284
        %v342 = vunpack.c.l.b16 %v285
        %v343 = vunpack.c.l.b16 %v286
        %v344 = vunpack.c.l.b16 %v287
        %v345 = vunpack.c.l.b16 %v288
        %v346 = vpack.c.b16 %v327, %v326
        %v347 = vpack.c.b16 %v329, %v328
        %v348 = vpack.c.b16 %v331, %v330
        %v349 = vpack.c.b16 %v333, %v332
        %v350 = vpack.c.b16 %v335, %v334
        %v351 = vpack.c.b16 %v337, %v336
        %v352 = vpack.c.b16 %v339, %v338
        %v353 = vpack.c.b16 %v341, %v340
        %v354 = vpack.c.b16 %v343, %v342
        %v355 = vpack.c.b16 %v345, %v344
        %v361 = vunpack.c.l.b16 %v289
        %v362 = vunpack.c.h.b16 %v289
        %v363 = vunpack.c.l.b16 %v290
        %v364 = vunpack.c.h.b16 %v290
        %v365 = vunpack.c.l.b16 %v291
        %v366 = vunpack.c.h.b16 %v291
        %v367 = vunpack.c.l.b16 %v292
        %v368 = vunpack.c.h.b16 %v292
        %v369 = vunpack.c.l.b16 %v293
        %v370 = vunpack.c.h.b16 %v293
        %v371 = vpack.c.b16 %v363, %v361
        %v372 = vpack.c.b16 %v364, %v362
        %v373 = vpack.c.b16 %v367, %v365
        %v374 = vpack.c.b16 %v368, %v366
        %v375 = vpack.c.b16 %v369, %v369
        %v376 = vpack.c.b16 %v370, %v370
        %vm381 = vcmask 293888
        %v383 = vsel %vm381, %v346, 0
        %v386 = vsel %vm381, %v347, 0
        %v389 = vsel %vm381, %v348, 0
        %v392 = vsel %vm381, %v349, 0
        %v395 = vsel %vm381, %v350, 0
        %v398 = vsel %vm381, %v351, 0
        %v401 = vsel %vm381, %v352, 0
        %v404 = vsel %vm381, %v353, 0
        %v407 = vsel %vm381, %v354, 0
        %v410 = vsel %vm381, %v355, 0
        %vm412 = vcmask 1041408
        %v414 = vsel %vm412, %v375, 0
        %v417 = vsel %vm412, %v376, 0
        %419 = vmatprep.subr.bf16.mxu0 %v372
        %420 = vmatpush1.bf16.msra.mxu0 %v371
        %421 = vmatprep.subr.bf16.mxu0 %v374
        %422 = vmatpush1.bf16.msra.mxu0 %v373
        %423 = vmatprep.subr.bf16.mxu0 %v417
        %424 = vmatpush1.bf16.msra.mxu0 %v414
        %425 = vmatprep.subr.bf16.mxu0 0
        %426 = vmatpush1.bf16.msra.mxu0 0
        %427 = vmatprep.subr.bf16.mxu0 0
        %428 = vmatpush1.bf16.msra.mxu0 0
        %429 = vmatprep.subr.bf16.mxu0 0
        %430 = vmatpush1.bf16.msra.mxu0 0
        %431 = vmatprep.subr.bf16.mxu0 0
        %432 = vmatpush1.bf16.msra.mxu0 0
        %433 = vmatprep.subr.bf16.mxu0 0
        %434 = vmatpush1.bf16.msra.mxu0 0
        %435 = vmatprep.subr.bf16.mxu0 0
        %436 = vmatpush1.bf16.msra.mxu0 0
        %437 = vmatprep.subr.bf16.mxu0 0
        %438 = vmatpush1.bf16.msra.mxu0 0
        %439 = vmatprep.subr.bf16.mxu0 0
        %440 = vmatpush1.bf16.msra.mxu0 0
        %441 = vmatprep.subr.bf16.mxu0 0
        %442 = vmatpush1.bf16.msra.mxu0 0
        %443 = vmatprep.subr.bf16.mxu0 0
        %444 = vmatpush1.bf16.msra.mxu0 0
        %445 = vmatprep.subr.bf16.mxu0 0
        %446 = vmatpush1.bf16.msra.mxu0 0
        %447 = vmatprep.subr.bf16.mxu0 0
        %448 = vmatpush1.bf16.msra.mxu0 0
        %449 = vmatprep.subr.bf16.mxu0 0
        %450 = vmatpush1.bf16.msra.mxu0 0
        %451 = vmatprep.mubr.bf16.mxu0 0
        %452 = vmatmul.mubr.bf16.gmra.mrb[0].mxu0 %v383
        %v453 = vpop.f32.mrb[0].mxu0
        %v454 = vadd.f32 %v299, %v453
        %v455 = vpop.f32.mrb[0].mxu0
        %v456 = vpop.f32.mrb[0].mxu0
        %v457 = vadd.f32 %v299, %v456
        %v458 = vpop.f32.mrb[0].mxu0
        %459 = vmatprep.mubr.bf16.mxu0 0
        %460 = vmatmul.mubr.bf16.gmra.mrb[0].mxu0 %v386
        %v461 = vpop.f32.mrb[0].mxu0
        %v462 = vadd.f32 %v299, %v461
        %v463 = vpop.f32.mrb[0].mxu0
        %v464 = vadd.f32 %v303, %v463
        %v465 = vpop.f32.mrb[0].mxu0
        %v466 = vadd.f32 %v299, %v465
        %v467 = vpop.f32.mrb[0].mxu0
        %v468 = vadd.f32 %v303, %v467
        %469 = vmatprep.mubr.bf16.mxu0 0
        %470 = vmatmul.mubr.bf16.gmra.mrb[0].mxu0 %v389
        %v471 = vpop.f32.mrb[0].mxu0
        %v472 = vadd.f32 %v299, %v471
        %v473 = vpop.f32.mrb[0].mxu0
        %v474 = vadd.f32 %v303, %v473
        %v475 = vpop.f32.mrb[0].mxu0
        %v476 = vadd.f32 %v299, %v475
        %v477 = vpop.f32.mrb[0].mxu0
        %v478 = vadd.f32 %v303, %v477
        %479 = vmatprep.mubr.bf16.mxu0 0
        %480 = vmatmul.mubr.bf16.gmra.mrb[0].mxu0 %v392
        %v481 = vpop.f32.mrb[0].mxu0
        %v482 = vadd.f32 %v299, %v481
        %v483 = vpop.f32.mrb[0].mxu0
        %v484 = vadd.f32 %v303, %v483
        %v485 = vpop.f32.mrb[0].mxu0
        %v486 = vadd.f32 %v299, %v485
        %v487 = vpop.f32.mrb[0].mxu0
        %v488 = vadd.f32 %v303, %v487
        %489 = vmatprep.mubr.bf16.mxu0 0
        %490 = vmatmul.mubr.bf16.gmra.mrb[0].mxu0 %v395
        %v491 = vpop.f32.mrb[0].mxu0
        %v492 = vadd.f32 %v299, %v491
        %v493 = vpop.f32.mrb[0].mxu0
        %v494 = vadd.f32 %v303, %v493
        %v495 = vpop.f32.mrb[0].mxu0
        %v496 = vadd.f32 %v299, %v495
        %v497 = vpop.f32.mrb[0].mxu0
        %v498 = vadd.f32 %v303, %v497
        %499 = vmatprep.mubr.bf16.mxu0 0
        %500 = vmatmul.mubr.bf16.gmra.mrb[0].mxu0 %v398
        %v501 = vpop.f32.mrb[0].mxu0
        %v502 = vadd.f32 %v299, %v501
        %v503 = vpop.f32.mrb[0].mxu0
        %v504 = vadd.f32 %v303, %v503
        %v505 = vpop.f32.mrb[0].mxu0
        %v506 = vadd.f32 %v299, %v505
        %v507 = vpop.f32.mrb[0].mxu0
        %v508 = vadd.f32 %v303, %v507
        %509 = vmatprep.mubr.bf16.mxu0 0
        %510 = vmatmul.mubr.bf16.gmra.mrb[0].mxu0 %v401
        %v511 = vpop.f32.mrb[0].mxu0
        %v512 = vadd.f32 %v299, %v511
        %v513 = vpop.f32.mrb[0].mxu0
        %v514 = vadd.f32 %v303, %v513
        %v515 = vpop.f32.mrb[0].mxu0
        %v516 = vadd.f32 %v299, %v515
        %v517 = vpop.f32.mrb[0].mxu0
        %v518 = vadd.f32 %v303, %v517
        %519 = vmatprep.mubr.bf16.mxu0 0
        %520 = vmatmul.mubr.bf16.gmra.mrb[0].mxu0 %v404
        %v521 = vpop.f32.mrb[0].mxu0
        %v522 = vadd.f32 %v299, %v521
        %v523 = vpop.f32.mrb[0].mxu0
        %v524 = vadd.f32 %v303, %v523
        %v525 = vpop.f32.mrb[0].mxu0
        %v526 = vadd.f32 %v299, %v525
        %v527 = vpop.f32.mrb[0].mxu0
        %v528 = vadd.f32 %v303, %v527
        %529 = vmatprep.mubr.bf16.mxu0 0
        %530 = vmatmul.mubr.bf16.gmra.mrb[0].mxu0 %v407
        %v531 = vpop.f32.mrb[0].mxu0
        %v532 = vadd.f32 %v299, %v531
        %v533 = vpop.f32.mrb[0].mxu0
        %v534 = vadd.f32 %v303, %v533
        %v535 = vpop.f32.mrb[0].mxu0
        %v536 = vadd.f32 %v299, %v535
        %v537 = vpop.f32.mrb[0].mxu0
        %v538 = vadd.f32 %v303, %v537
        %539 = vmatprep.mubr.bf16.mxu0 0
        %540 = vmatmul.mubr.bf16.gmra.mrb[0].mxu0 %v410
        %v541 = vpop.f32.mrb[0].mxu0
        %v542 = vadd.f32 %v299, %v541
        %v543 = vpop.f32.mrb[0].mxu0
        %v544 = vpop.f32.mrb[0].mxu0
        %v545 = vadd.f32 %v299, %v544
        %v546 = vpop.f32.mrb[0].mxu0
        %547 = vdwg.mxu0
        %v548 = vmax.f32 %v454, 0.0
        %v549 = vmax.f32 %v457, 0.0
        %v550 = vmax.f32 %v462, 0.0
        %v551 = vmax.f32 %v466, 0.0
        %v552 = vmax.f32 %v472, 0.0
        %v553 = vmax.f32 %v476, 0.0
        %v554 = vmax.f32 %v482, 0.0
        %v555 = vmax.f32 %v486, 0.0
        %v556 = vmax.f32 %v492, 0.0
        %v557 = vmax.f32 %v496, 0.0
        %v558 = vmax.f32 %v502, 0.0
        %v559 = vmax.f32 %v506, 0.0
        %v560 = vmax.f32 %v512, 0.0
        %v561 = vmax.f32 %v516, 0.0
        %v562 = vmax.f32 %v522, 0.0
        %v563 = vmax.f32 %v526, 0.0
        %v564 = vmax.f32 %v532, 0.0
        %v565 = vmax.f32 %v536, 0.0
        %v566 = vmax.f32 %v542, 0.0
        %v567 = vmax.f32 %v545, 0.0
        %v568 = vpack.c.bf16 %v549, %v548
        %v569 = vpack.c.bf16 %v551, %v550
        %v570 = vpack.c.bf16 %v553, %v552
        %v571 = vpack.c.bf16 %v555, %v554
        %v572 = vpack.c.bf16 %v557, %v556
        %v573 = vpack.c.bf16 %v559, %v558
        %v574 = vpack.c.bf16 %v561, %v560
        %v575 = vpack.c.bf16 %v563, %v562
        %v576 = vpack.c.bf16 %v565, %v564
        %v577 = vpack.c.bf16 %v567, %v566
        %v588 = vunpack.c.l.b16 %v568
        %v589 = vunpack.c.h.b16 %v568
        %v590 = vunpack.c.l.b16 %v569
        %v591 = vunpack.c.h.b16 %v569
        %v592 = vunpack.c.l.b16 %v570
        %v593 = vunpack.c.h.b16 %v570
        %v594 = vunpack.c.l.b16 %v571
        %v595 = vunpack.c.h.b16 %v571
        %v596 = vunpack.c.l.b16 %v572
        %v597 = vunpack.c.h.b16 %v572
        %v598 = vunpack.c.l.b16 %v573
        %v599 = vunpack.c.h.b16 %v573
        %v600 = vunpack.c.l.b16 %v574
        %v601 = vunpack.c.h.b16 %v574
        %v602 = vunpack.c.l.b16 %v575
        %v603 = vunpack.c.h.b16 %v575
        %v604 = vunpack.c.l.b16 %v576
        %v605 = vunpack.c.h.b16 %v576
        %v606 = vunpack.c.l.b16 %v577
        %v607 = vunpack.c.h.b16 %v577
        %v608 = vpack.c.b16 %v588, %v588
        %v609 = vpack.c.b16 %v589, %v589
        %v610 = vpack.c.b16 %v590, %v590
        %v611 = vpack.c.b16 %v591, %v591
        %v612 = vpack.c.b16 %v592, %v592
        %v613 = vpack.c.b16 %v593, %v593
        %v614 = vpack.c.b16 %v594, %v594
        %v615 = vpack.c.b16 %v595, %v595
        %v616 = vpack.c.b16 %v596, %v596
        %v617 = vpack.c.b16 %v597, %v597
        %v618 = vpack.c.b16 %v598, %v598
        %v619 = vpack.c.b16 %v599, %v599
        %v620 = vpack.c.b16 %v600, %v600
        %v621 = vpack.c.b16 %v601, %v601
        %v622 = vpack.c.b16 %v602, %v602
        %v623 = vpack.c.b16 %v603, %v603
        %v624 = vpack.c.b16 %v604, %v604
        %v625 = vpack.c.b16 %v605, %v605
        %v626 = vpack.c.b16 %v606, %v606
        %v627 = vpack.c.b16 %v607, %v607
        %vm628 = vsmask.f32 256
        %vm629 = vsmask.f32 4368
        %vm630 = vmor %vm628, %vm629
        %v632 = vshrl.u32 %v608, 16
        %v634 = vrot.slane %v632, 7
        %v635 = vshll.u32 %v608, 16
        %v637 = vor.u32 %v634, %v635
        %v638 = vrot.slane %v634, 4
        %v640 = vshrl.u32 %v609, 16
        %v642 = vrot.slane %v640, 7
        %v643 = vshll.u32 %v609, 16
        %v645 = vor.u32 %v642, %v643
        %v646 = vsel %vm630, %v638, %v645
        %v647 = vrot.slane %v642, 4
        %v649 = vshrl.u32 %v610, 16
        %v651 = vrot.slane %v649, 7
        %v652 = vshll.u32 %v610, 16
        %v654 = vor.u32 %v651, %v652
        %v655 = vrot.slane %v651, 4
        %v657 = vshrl.u32 %v611, 16
        %v659 = vrot.slane %v657, 7
        %v660 = vshll.u32 %v611, 16
        %v662 = vor.u32 %v659, %v660
        %v663 = vsel %vm630, %v655, %v662
        %v664 = vrot.slane %v659, 4
        %v666 = vshrl.u32 %v612, 16
        %v668 = vrot.slane %v666, 7
        %v669 = vshll.u32 %v612, 16
        %v671 = vor.u32 %v668, %v669
        %v672 = vrot.slane %v668, 4
        %v674 = vshrl.u32 %v613, 16
        %v676 = vrot.slane %v674, 7
        %v677 = vshll.u32 %v613, 16
        %v679 = vor.u32 %v676, %v677
        %v680 = vsel %vm630, %v672, %v679
        %v681 = vrot.slane %v676, 4
        %v683 = vshrl.u32 %v614, 16
        %v685 = vrot.slane %v683, 7
        %v686 = vshll.u32 %v614, 16
        %v688 = vor.u32 %v685, %v686
        %v689 = vrot.slane %v685, 4
        %v691 = vshrl.u32 %v615, 16
        %v693 = vrot.slane %v691, 7
        %v694 = vshll.u32 %v615, 16
        %v696 = vor.u32 %v693, %v694
        %v697 = vsel %vm630, %v689, %v696
        %v698 = vrot.slane %v693, 4
        %v700 = vshrl.u32 %v616, 16
        %v702 = vrot.slane %v700, 7
        %v703 = vshll.u32 %v616, 16
        %v705 = vor.u32 %v702, %v703
        %v706 = vrot.slane %v702, 4
        %v708 = vshrl.u32 %v617, 16
        %v710 = vrot.slane %v708, 7
        %v711 = vshll.u32 %v617, 16
        %v713 = vor.u32 %v710, %v711
        %v714 = vsel %vm630, %v706, %v713
        %v715 = vrot.slane %v710, 4
        %v717 = vshrl.u32 %v618, 16
        %v719 = vrot.slane %v717, 7
        %v720 = vshll.u32 %v618, 16
        %v722 = vor.u32 %v719, %v720
        %v723 = vrot.slane %v719, 4
        %v725 = vshrl.u32 %v619, 16
        %v727 = vrot.slane %v725, 7
        %v728 = vshll.u32 %v619, 16
        %v730 = vor.u32 %v727, %v728
        %v731 = vsel %vm630, %v723, %v730
        %v732 = vrot.slane %v727, 4
        %v734 = vshrl.u32 %v620, 16
        %v736 = vrot.slane %v734, 7
        %v737 = vshll.u32 %v620, 16
        %v739 = vor.u32 %v736, %v737
        %v740 = vrot.slane %v736, 4
        %v742 = vshrl.u32 %v621, 16
        %v744 = vrot.slane %v742, 7
        %v745 = vshll.u32 %v621, 16
        %v747 = vor.u32 %v744, %v745
        %v748 = vsel %vm630, %v740, %v747
        %v749 = vrot.slane %v744, 4
        %v751 = vshrl.u32 %v622, 16
        %v753 = vrot.slane %v751, 7
        %v754 = vshll.u32 %v622, 16
        %v756 = vor.u32 %v753, %v754
        %v757 = vrot.slane %v753, 4
        %v759 = vshrl.u32 %v623, 16
        %v761 = vrot.slane %v759, 7
        %v762 = vshll.u32 %v623, 16
        %v764 = vor.u32 %v761, %v762
        %v765 = vsel %vm630, %v757, %v764
        %v766 = vrot.slane %v761, 4
        %v768 = vshrl.u32 %v624, 16
        %v770 = vrot.slane %v768, 7
        %v771 = vshll.u32 %v624, 16
        %v773 = vor.u32 %v770, %v771
        %v774 = vrot.slane %v770, 4
        %v776 = vshrl.u32 %v625, 16
        %v778 = vrot.slane %v776, 7
        %v779 = vshll.u32 %v625, 16
        %v781 = vor.u32 %v778, %v779
        %v782 = vsel %vm630, %v774, %v781
        %v783 = vrot.slane %v778, 4
        %v785 = vshrl.u32 %v626, 16
        %v787 = vrot.slane %v785, 7
        %v788 = vshll.u32 %v626, 16
        %v790 = vor.u32 %v787, %v788
        %v791 = vrot.slane %v787, 4
        %v793 = vshrl.u32 %v627, 16
        %v795 = vrot.slane %v793, 7
        %v796 = vshll.u32 %v627, 16
        %v798 = vor.u32 %v795, %v796
        %v799 = vsel %vm630, %v791, %v798
        %v800 = vrot.slane %v795, 4
        %vm831 = vcmask 1043456
        %vm832 = vsmask.f32 7938
        %vm833 = vmand %vm831, %vm832
        %v834 = vld [vmem:[#allocation2] sm:$0xf]
        %v835 = vsel %vm833, %v637, %v834
        %836 = vst [vmem:[#allocation2] sm:$0xf] %v835
        %837 = vst [vmem:[#allocation2 + $0x4] sm:$0xf] %v646
        %vm838 = vcmask 1040384
        %vm839 = vmand %vm838, %vm628
        %v840 = vld [vmem:[#allocation2 + $0x8] sm:$0x1]
        %v841 = vsel %vm839, %v647, %v840
        %842 = vst [vmem:[#allocation2 + $0x8] sm:$0x1] %v841
        %v843 = vld [vmem:[#allocation2 + $0xc] sm:$0xf]
        %v844 = vsel %vm833, %v654, %v843
        %845 = vst [vmem:[#allocation2 + $0xc] sm:$0xf] %v844
        %846 = vst [vmem:[#allocation2 + $0x10] sm:$0xf] %v663
        %v847 = vld [vmem:[#allocation2 + $0x14] sm:$0x1]
        %v848 = vsel %vm839, %v664, %v847
        %849 = vst [vmem:[#allocation2 + $0x14] sm:$0x1] %v848
        %v850 = vld [vmem:[#allocation2 + $0x18] sm:$0xf]
        %v851 = vsel %vm833, %v671, %v850
        %852 = vst [vmem:[#allocation2 + $0x18] sm:$0xf] %v851
        %853 = vst [vmem:[#allocation2 + $0x1c] sm:$0xf] %v680
        %v854 = vld [vmem:[#allocation2 + $0x20] sm:$0x1]
        %v855 = vsel %vm839, %v681, %v854
        %856 = vst [vmem:[#allocation2 + $0x20] sm:$0x1] %v855
        %v857 = vld [vmem:[#allocation2 + $0x24] sm:$0xf]
        %v858 = vsel %vm833, %v688, %v857
        %859 = vst [vmem:[#allocation2 + $0x24] sm:$0xf] %v858
        %860 = vst [vmem:[#allocation2 + $0x28] sm:$0xf] %v697
        %v861 = vld [vmem:[#allocation2 + $0x2c] sm:$0x1]
        %v862 = vsel %vm839, %v698, %v861
        %863 = vst [vmem:[#allocation2 + $0x2c] sm:$0x1] %v862
        %v864 = vld [vmem:[#allocation2 + $0x30] sm:$0xf]
        %v865 = vsel %vm833, %v705, %v864
        %866 = vst [vmem:[#allocation2 + $0x30] sm:$0xf] %v865
        %867 = vst [vmem:[#allocation2 + $0x34] sm:$0xf] %v714
        %v868 = vld [vmem:[#allocation2 + $0x38] sm:$0x1]
        %v869 = vsel %vm839, %v715, %v868
        %870 = vst [vmem:[#allocation2 + $0x38] sm:$0x1] %v869
        %v871 = vld [vmem:[#allocation2 + $0x3c] sm:$0xf]
        %v872 = vsel %vm833, %v722, %v871
        %873 = vst [vmem:[#allocation2 + $0x3c] sm:$0xf] %v872
        %874 = vst [vmem:[#allocation2 + $0x40] sm:$0xf] %v731
        %v875 = vld [vmem:[#allocation2 + $0x44] sm:$0x1]
        %v876 = vsel %vm839, %v732, %v875
        %877 = vst [vmem:[#allocation2 + $0x44] sm:$0x1] %v876
        %v878 = vld [vmem:[#allocation2 + $0x48] sm:$0xf]
        %v879 = vsel %vm833, %v739, %v878
        %880 = vst [vmem:[#allocation2 + $0x48] sm:$0xf] %v879
        %881 = vst [vmem:[#allocation2 + $0x4c] sm:$0xf] %v748
        %v882 = vld [vmem:[#allocation2 + $0x50] sm:$0x1]
        %v883 = vsel %vm839, %v749, %v882
        %884 = vst [vmem:[#allocation2 + $0x50] sm:$0x1] %v883
        %v885 = vld [vmem:[#allocation2 + $0x54] sm:$0xf]
        %v886 = vsel %vm833, %v756, %v885
        %887 = vst [vmem:[#allocation2 + $0x54] sm:$0xf] %v886
        %888 = vst [vmem:[#allocation2 + $0x58] sm:$0xf] %v765
        %v889 = vld [vmem:[#allocation2 + $0x5c] sm:$0x1]
        %v890 = vsel %vm839, %v766, %v889
        %891 = vst [vmem:[#allocation2 + $0x5c] sm:$0x1] %v890
        %v892 = vld [vmem:[#allocation2 + $0x60] sm:$0xf]
        %v893 = vsel %vm833, %v773, %v892
        %894 = vst [vmem:[#allocation2 + $0x60] sm:$0xf] %v893
        %895 = vst [vmem:[#allocation2 + $0x64] sm:$0xf] %v782
        %v896 = vld [vmem:[#allocation2 + $0x68] sm:$0x1]
        %v897 = vsel %vm839, %v783, %v896
        %898 = vst [vmem:[#allocation2 + $0x68] sm:$0x1] %v897
        %v899 = vld [vmem:[#allocation2 + $0x6c] sm:$0xf]
        %v900 = vsel %vm833, %v790, %v899
        %901 = vst [vmem:[#allocation2 + $0x6c] sm:$0xf] %v900
        %902 = vst [vmem:[#allocation2 + $0x70] sm:$0xf] %v799
        %v903 = vld [vmem:[#allocation2 + $0x74] sm:$0x1]
        %v904 = vsel %vm839, %v800, %v903
        %905 = vst [vmem:[#allocation2 + $0x74] sm:$0x1] %v904
        %v906 = vld [vmem:[#allocation2] sm:$0x1]
        %v907 = vsel %vm839, 0, %v906
        %908 = vst [vmem:[#allocation2] sm:$0x1] %v907
        %v909 = vld [vmem:[#allocation2 + $0xc] sm:$0x1]
        %v910 = vsel %vm839, 0, %v909
        %911 = vst [vmem:[#allocation2 + $0xc] sm:$0x1] %v910
        %v912 = vld [vmem:[#allocation2 + $0x18] sm:$0x1]
        %v913 = vsel %vm839, 0, %v912
        %914 = vst [vmem:[#allocation2 + $0x18] sm:$0x1] %v913
        %v915 = vld [vmem:[#allocation2 + $0x24] sm:$0x1]
        %v916 = vsel %vm839, 0, %v915
        %917 = vst [vmem:[#allocation2 + $0x24] sm:$0x1] %v916
        %v918 = vld [vmem:[#allocation2 + $0x30] sm:$0x1]
        %v919 = vsel %vm839, 0, %v918
        %920 = vst [vmem:[#allocation2 + $0x30] sm:$0x1] %v919
        %v921 = vld [vmem:[#allocation2 + $0x3c] sm:$0x1]
        %v922 = vsel %vm839, 0, %v921
        %923 = vst [vmem:[#allocation2 + $0x3c] sm:$0x1] %v922
        %v924 = vld [vmem:[#allocation2 + $0x48] sm:$0x1]
        %v925 = vsel %vm839, 0, %v924
        %926 = vst [vmem:[#allocation2 + $0x48] sm:$0x1] %v925
        %v927 = vld [vmem:[#allocation2 + $0x54] sm:$0x1]
        %v928 = vsel %vm839, 0, %v927
        %929 = vst [vmem:[#allocation2 + $0x54] sm:$0x1] %v928
        %v930 = vld [vmem:[#allocation2 + $0x60] sm:$0x1]
        %v931 = vsel %vm839, 0, %v930
        %932 = vst [vmem:[#allocation2 + $0x60] sm:$0x1] %v931
        %v933 = vld [vmem:[#allocation2 + $0x6c] sm:$0x1]
        %v934 = vsel %vm839, 0, %v933
        %935 = vst [vmem:[#allocation2 + $0x6c] sm:$0x1] %v934
        %vm936 = vmand %vm838, %vm832
        %v937 = vld [vmem:[#allocation2 + $0x8] sm:$0x1]
        %v938 = vsel %vm936, 0, %v937
        %939 = vst [vmem:[#allocation2 + $0x8] sm:$0x1] %v938
        %v940 = vld [vmem:[#allocation2 + $0x14] sm:$0x1]
        %v941 = vsel %vm936, 0, %v940
        %942 = vst [vmem:[#allocation2 + $0x14] sm:$0x1] %v941
        %v943 = vld [vmem:[#allocation2 + $0x20] sm:$0x1]
        %v944 = vsel %vm936, 0, %v943
        %945 = vst [vmem:[#allocation2 + $0x20] sm:$0x1] %v944
        %v946 = vld [vmem:[#allocation2 + $0x2c] sm:$0x1]
        %v947 = vsel %vm936, 0, %v946
        %948 = vst [vmem:[#allocation2 + $0x2c] sm:$0x1] %v947
        %v949 = vld [vmem:[#allocation2 + $0x38] sm:$0x1]
        %v950 = vsel %vm936, 0, %v949
        %951 = vst [vmem:[#allocation2 + $0x38] sm:$0x1] %v950
        %v952 = vld [vmem:[#allocation2 + $0x44] sm:$0x1]
        %v953 = vsel %vm936, 0, %v952
        %954 = vst [vmem:[#allocation2 + $0x44] sm:$0x1] %v953
        %v955 = vld [vmem:[#allocation2 + $0x50] sm:$0x1]
        %v956 = vsel %vm936, 0, %v955
        %957 = vst [vmem:[#allocation2 + $0x50] sm:$0x1] %v956
        %v958 = vld [vmem:[#allocation2 + $0x5c] sm:$0x1]
        %v959 = vsel %vm936, 0, %v958
        %960 = vst [vmem:[#allocation2 + $0x5c] sm:$0x1] %v959
        %v961 = vld [vmem:[#allocation2 + $0x68] sm:$0x1]
        %v962 = vsel %vm936, 0, %v961
        %963 = vst [vmem:[#allocation2 + $0x68] sm:$0x1] %v962
        %v964 = vld [vmem:[#allocation2 + $0x74] sm:$0x1]
        %v965 = vsel %vm936, 0, %v964
        %966 = vst [vmem:[#allocation2 + $0x74] sm:$0x1] %v965
        %p967 = scmp.eq.s32.totalorder %s27, 0
        // Predicated region
        $region49: #{tpu_custom_call.1} parent=35 // pred_check
          %p968 = pneg %p967
        $region50: #{tpu_custom_call.1} parent=35 // pred_check_branch
          %970 = sbr.rel (%p968) target = $region52
        $region51: #{tpu_custom_call.1} parent=35 // pred_region
          %971 = vst [vmem:[#allocation2] sm:$0xf] 0
          %972 = vst [vmem:[#allocation2 + $0x4] sm:$0xf] 0
          %973 = vst [vmem:[#allocation2 + $0x8] sm:$0x1] 0
        $region52: #{tpu_custom_call.1} parent=35 // pred_fallthru
          _
        %p974 = scmp.eq.s32.totalorder %s27, 1
        // Predicated region
        $region53: #{tpu_custom_call.1} parent=35 // pred_check
          %p975 = pneg %p974
        $region54: #{tpu_custom_call.1} parent=35 // pred_check_branch
          %977 = sbr.rel (%p975) target = $region56
        $region55: #{tpu_custom_call.1} parent=35 // pred_region
          %s978 = scalar_lea.vmem [#allocation2], 108
          %979 = vst [vmem:[%s978] sm:$0xf] 0
          %980 = vst [vmem:[%s978 + $0x4] sm:$0xf] 0
          %981 = vst [vmem:[%s978 + $0x8] sm:$0x1] 0
        $region56: #{tpu_custom_call.1} parent=35 // pred_fallthru
          _
        %v982 = vld [vmem:[#allocation2] sm:$0xf]
        %v983 = vld [vmem:[#allocation2 + $0x4] sm:$0xf]
        %v984 = vld [vmem:[#allocation2 + $0xc] sm:$0xf]
        %v985 = vld [vmem:[#allocation2 + $0x10] sm:$0xf]
        %v986 = vld [vmem:[#allocation2 + $0x18] sm:$0xf]
        %v987 = vld [vmem:[#allocation2 + $0x1c] sm:$0xf]
        %v988 = vld [vmem:[#allocation2 + $0x24] sm:$0xf]
        %v989 = vld [vmem:[#allocation2 + $0x28] sm:$0xf]
        %v990 = vld [vmem:[#allocation2 + $0x30] sm:$0xf]
        %v991 = vld [vmem:[#allocation2 + $0x34] sm:$0xf]
        %v992 = vld [vmem:[#allocation2 + $0x3c] sm:$0xf]
        %v993 = vld [vmem:[#allocation2 + $0x40] sm:$0xf]
        %v994 = vld [vmem:[#allocation2 + $0x48] sm:$0xf]
        %v995 = vld [vmem:[#allocation2 + $0x4c] sm:$0xf]
        %v996 = vld [vmem:[#allocation2 + $0x54] sm:$0xf]
        %v997 = vld [vmem:[#allocation2 + $0x58] sm:$0xf]
        %v998 = vld [vmem:[#allocation2 + $0x60] sm:$0xf]
        %v999 = vld [vmem:[#allocation2 + $0x64] sm:$0xf]
        %v1000 = vld [vmem:[#allocation2 + $0x6c] sm:$0xf]
        %v1001 = vld [vmem:[#allocation2 + $0x70] sm:$0xf]
        %v1022 = vunpack.c.l.b16 %v982
        %v1023 = vunpack.c.l.b16 %v983
        %v1024 = vunpack.c.l.b16 %v984
        %v1025 = vunpack.c.l.b16 %v985
        %v1026 = vunpack.c.l.b16 %v986
        %v1027 = vunpack.c.l.b16 %v987
        %v1028 = vunpack.c.l.b16 %v988
        %v1029 = vunpack.c.l.b16 %v989
        %v1030 = vunpack.c.l.b16 %v990
        %v1031 = vunpack.c.l.b16 %v991
        %v1032 = vunpack.c.l.b16 %v992
        %v1033 = vunpack.c.l.b16 %v993
        %v1034 = vunpack.c.l.b16 %v994
        %v1035 = vunpack.c.l.b16 %v995
        %v1036 = vunpack.c.l.b16 %v996
        %v1037 = vunpack.c.l.b16 %v997
        %v1038 = vunpack.c.l.b16 %v998
        %v1039 = vunpack.c.l.b16 %v999
        %v1040 = vunpack.c.l.b16 %v1000
        %v1041 = vunpack.c.l.b16 %v1001
        %v1042 = vpack.c.b16 %v1023, %v1022
        %v1043 = vpack.c.b16 %v1025, %v1024
        %v1044 = vpack.c.b16 %v1027, %v1026
        %v1045 = vpack.c.b16 %v1029, %v1028
        %v1046 = vpack.c.b16 %v1031, %v1030
        %v1047 = vpack.c.b16 %v1033, %v1032
        %v1048 = vpack.c.b16 %v1035, %v1034
        %v1049 = vpack.c.b16 %v1037, %v1036
        %v1050 = vpack.c.b16 %v1039, %v1038
        %v1051 = vpack.c.b16 %v1041, %v1040
        %1062 = vst [vmem:[#allocation3] sm:$0xff] %v1042
        %1063 = vst [vmem:[#allocation3 + $0x18] sm:$0xff] %v1043
        %1064 = vst [vmem:[#allocation3 + $0x30] sm:$0xff] %v1044
        %1065 = vst [vmem:[#allocation3 + $0x48] sm:$0xff] %v1045
        %1066 = vst [vmem:[#allocation3 + $0x60] sm:$0xff] %v1046
        %1067 = vst [vmem:[#allocation3 + $0x78] sm:$0xff] %v1047
        %1068 = vst [vmem:[#allocation3 + $0x90] sm:$0xff] %v1048
        %1069 = vst [vmem:[#allocation3 + $0xa8] sm:$0xff] %v1049
        %1070 = vst [vmem:[#allocation3 + $0xc0] sm:$0xff] %v1050
        %1071 = vst [vmem:[#allocation3 + $0xd8] sm:$0xff] %v1051
        %v1072 = vld [vmem:[#allocation2] sm:$0xf]
        %v1073 = vld [vmem:[#allocation2 + $0x4] sm:$0xf]
        %v1074 = vld [vmem:[#allocation2 + $0x8] sm:$0x1]
        %v1075 = vld [vmem:[#allocation2 + $0xc] sm:$0xf]
        %v1076 = vld [vmem:[#allocation2 + $0x10] sm:$0xf]
        %v1077 = vld [vmem:[#allocation2 + $0x14] sm:$0x1]
        %v1078 = vld [vmem:[#allocation2 + $0x18] sm:$0xf]
        %v1079 = vld [vmem:[#allocation2 + $0x1c] sm:$0xf]
        %v1080 = vld [vmem:[#allocation2 + $0x20] sm:$0x1]
        %v1081 = vld [vmem:[#allocation2 + $0x24] sm:$0xf]
        %v1082 = vld [vmem:[#allocation2 + $0x28] sm:$0xf]
        %v1083 = vld [vmem:[#allocation2 + $0x2c] sm:$0x1]
        %v1084 = vld [vmem:[#allocation2 + $0x30] sm:$0xf]
        %v1085 = vld [vmem:[#allocation2 + $0x34] sm:$0xf]
        %v1086 = vld [vmem:[#allocation2 + $0x38] sm:$0x1]
        %v1087 = vld [vmem:[#allocation2 + $0x3c] sm:$0xf]
        %v1088 = vld [vmem:[#allocation2 + $0x40] sm:$0xf]
        %v1089 = vld [vmem:[#allocation2 + $0x44] sm:$0x1]
        %v1090 = vld [vmem:[#allocation2 + $0x48] sm:$0xf]
        %v1091 = vld [vmem:[#allocation2 + $0x4c] sm:$0xf]
        %v1092 = vld [vmem:[#allocation2 + $0x50] sm:$0x1]
        %v1093 = vld [vmem:[#allocation2 + $0x54] sm:$0xf]
        %v1094 = vld [vmem:[#allocation2 + $0x58] sm:$0xf]
        %v1095 = vld [vmem:[#allocation2 + $0x5c] sm:$0x1]
        %v1096 = vld [vmem:[#allocation2 + $0x60] sm:$0xf]
        %v1097 = vld [vmem:[#allocation2 + $0x64] sm:$0xf]
        %v1098 = vld [vmem:[#allocation2 + $0x68] sm:$0x1]
        %v1099 = vld [vmem:[#allocation2 + $0x6c] sm:$0xf]
        %v1100 = vld [vmem:[#allocation2 + $0x70] sm:$0xf]
        %v1101 = vld [vmem:[#allocation2 + $0x74] sm:$0x1]
        %v1132 = vunpack.c.l.b16 %v1072
        %v1133 = vunpack.c.l.b16 %v1073
        %v1134 = vunpack.c.l.b16 %v1074
        %v1135 = vunpack.c.l.b16 %v1075
        %v1136 = vunpack.c.l.b16 %v1076
        %v1137 = vunpack.c.l.b16 %v1077
        %v1138 = vunpack.c.l.b16 %v1078
        %v1139 = vunpack.c.l.b16 %v1079
        %v1140 = vunpack.c.l.b16 %v1080
        %v1141 = vunpack.c.l.b16 %v1081
        %v1142 = vunpack.c.l.b16 %v1082
        %v1143 = vunpack.c.l.b16 %v1083
        %v1144 = vunpack.c.l.b16 %v1084
        %v1145 = vunpack.c.l.b16 %v1085
        %v1146 = vunpack.c.l.b16 %v1086
        %v1147 = vunpack.c.l.b16 %v1087
        %v1148 = vunpack.c.l.b16 %v1088
        %v1149 = vunpack.c.l.b16 %v1089
        %v1150 = vunpack.c.l.b16 %v1090
        %v1151 = vunpack.c.l.b16 %v1091
        %v1152 = vunpack.c.l.b16 %v1092
        %v1153 = vunpack.c.l.b16 %v1093
        %v1154 = vunpack.c.l.b16 %v1094
        %v1155 = vunpack.c.l.b16 %v1095
        %v1156 = vunpack.c.l.b16 %v1096
        %v1157 = vunpack.c.l.b16 %v1097
        %v1158 = vunpack.c.l.b16 %v1098
        %v1159 = vunpack.c.l.b16 %v1099
        %v1160 = vunpack.c.l.b16 %v1100
        %v1161 = vunpack.c.l.b16 %v1101
        %v1162 = vpack.c.b16 %v1133, %v1132
        %v1163 = vpack.c.b16 %v1134, %v1134
        %v1164 = vpack.c.b16 %v1136, %v1135
        %v1165 = vpack.c.b16 %v1137, %v1137
        %v1166 = vpack.c.b16 %v1139, %v1138
        %v1167 = vpack.c.b16 %v1140, %v1140
        %v1168 = vpack.c.b16 %v1142, %v1141
        %v1169 = vpack.c.b16 %v1143, %v1143
        %v1170 = vpack.c.b16 %v1145, %v1144
        %v1171 = vpack.c.b16 %v1146, %v1146
        %v1172 = vpack.c.b16 %v1148, %v1147
        %v1173 = vpack.c.b16 %v1149, %v1149
        %v1174 = vpack.c.b16 %v1151, %v1150
        %v1175 = vpack.c.b16 %v1152, %v1152
        %v1176 = vpack.c.b16 %v1154, %v1153
        %v1177 = vpack.c.b16 %v1155, %v1155
        %v1178 = vpack.c.b16 %v1157, %v1156
        %v1179 = vpack.c.b16 %v1158, %v1158
        %v1180 = vpack.c.b16 %v1160, %v1159
        %v1181 = vpack.c.b16 %v1161, %v1161
        %vm1182 = vsmask.f32 7424
        %v1184 = vshrl.u32 %v1162, 16
        %v1186 = vshll.u32 %v1162, 16
        %v1188 = vrot.slane %v1186, 1
        %v1189 = vor.u32 %v1184, %v1188
        %v1191 = vshll.u32 %v1163, 16
        %v1193 = vrot.slane %v1191, 1
        %v1194 = vsel %vm1182, %v1189, %v1193
        %v1196 = vshrl.u32 %v1164, 16
        %v1198 = vshll.u32 %v1164, 16
        %v1200 = vrot.slane %v1198, 1
        %v1201 = vor.u32 %v1196, %v1200
        %v1203 = vshll.u32 %v1165, 16
        %v1205 = vrot.slane %v1203, 1
        %v1206 = vsel %vm1182, %v1201, %v1205
        %v1208 = vshrl.u32 %v1166, 16
        %v1210 = vshll.u32 %v1166, 16
        %v1212 = vrot.slane %v1210, 1
        %v1213 = vor.u32 %v1208, %v1212
        %v1215 = vshll.u32 %v1167, 16
        %v1217 = vrot.slane %v1215, 1
        %v1218 = vsel %vm1182, %v1213, %v1217
        %v1220 = vshrl.u32 %v1168, 16
        %v1222 = vshll.u32 %v1168, 16
        %v1224 = vrot.slane %v1222, 1
        %v1225 = vor.u32 %v1220, %v1224
        %v1227 = vshll.u32 %v1169, 16
        %v1229 = vrot.slane %v1227, 1
        %v1230 = vsel %vm1182, %v1225, %v1229
        %v1232 = vshrl.u32 %v1170, 16
        %v1234 = vshll.u32 %v1170, 16
        %v1236 = vrot.slane %v1234, 1
        %v1237 = vor.u32 %v1232, %v1236
        %v1239 = vshll.u32 %v1171, 16
        %v1241 = vrot.slane %v1239, 1
        %v1242 = vsel %vm1182, %v1237, %v1241
        %v1244 = vshrl.u32 %v1172, 16
        %v1246 = vshll.u32 %v1172, 16
        %v1248 = vrot.slane %v1246, 1
        %v1249 = vor.u32 %v1244, %v1248
        %v1251 = vshll.u32 %v1173, 16
        %v1253 = vrot.slane %v1251, 1
        %v1254 = vsel %vm1182, %v1249, %v1253
        %v1256 = vshrl.u32 %v1174, 16
        %v1258 = vshll.u32 %v1174, 16
        %v1260 = vrot.slane %v1258, 1
        %v1261 = vor.u32 %v1256, %v1260
        %v1263 = vshll.u32 %v1175, 16
        %v1265 = vrot.slane %v1263, 1
        %v1266 = vsel %vm1182, %v1261, %v1265
        %v1268 = vshrl.u32 %v1176, 16
        %v1270 = vshll.u32 %v1176, 16
        %v1272 = vrot.slane %v1270, 1
        %v1273 = vor.u32 %v1268, %v1272
        %v1275 = vshll.u32 %v1177, 16
        %v1277 = vrot.slane %v1275, 1
        %v1278 = vsel %vm1182, %v1273, %v1277
        %v1280 = vshrl.u32 %v1178, 16
        %v1282 = vshll.u32 %v1178, 16
        %v1284 = vrot.slane %v1282, 1
        %v1285 = vor.u32 %v1280, %v1284
        %v1287 = vshll.u32 %v1179, 16
        %v1289 = vrot.slane %v1287, 1
        %v1290 = vsel %vm1182, %v1285, %v1289
        %v1292 = vshrl.u32 %v1180, 16
        %v1294 = vshll.u32 %v1180, 16
        %v1296 = vrot.slane %v1294, 1
        %v1297 = vor.u32 %v1292, %v1296
        %v1299 = vshll.u32 %v1181, 16
        %v1301 = vrot.slane %v1299, 1
        %v1302 = vsel %vm1182, %v1297, %v1301
        %1313 = vst [vmem:[#allocation3 + $0x8] sm:$0xff] %v1194
        %1314 = vst [vmem:[#allocation3 + $0x20] sm:$0xff] %v1206
        %1315 = vst [vmem:[#allocation3 + $0x38] sm:$0xff] %v1218
        %1316 = vst [vmem:[#allocation3 + $0x50] sm:$0xff] %v1230
        %1317 = vst [vmem:[#allocation3 + $0x68] sm:$0xff] %v1242
        %1318 = vst [vmem:[#allocation3 + $0x80] sm:$0xff] %v1254
        %1319 = vst [vmem:[#allocation3 + $0x98] sm:$0xff] %v1266
        %1320 = vst [vmem:[#allocation3 + $0xb0] sm:$0xff] %v1278
        %1321 = vst [vmem:[#allocation3 + $0xc8] sm:$0xff] %v1290
        %1322 = vst [vmem:[#allocation3 + $0xe0] sm:$0xff] %v1302
        %v1323 = vld [vmem:[#allocation2] sm:$0xe]
        %v1324 = vld [vmem:[#allocation2 + $0x4] sm:$0xf]
        %v1325 = vld [vmem:[#allocation2 + $0x8] sm:$0x1]
        %v1326 = vld [vmem:[#allocation2 + $0xc] sm:$0xe]
        %v1327 = vld [vmem:[#allocation2 + $0x10] sm:$0xf]
        %v1328 = vld [vmem:[#allocation2 + $0x14] sm:$0x1]
        %v1329 = vld [vmem:[#allocation2 + $0x18] sm:$0xe]
        %v1330 = vld [vmem:[#allocation2 + $0x1c] sm:$0xf]
        %v1331 = vld [vmem:[#allocation2 + $0x20] sm:$0x1]
        %v1332 = vld [vmem:[#allocation2 + $0x24] sm:$0xe]
        %v1333 = vld [vmem:[#allocation2 + $0x28] sm:$0xf]
        %v1334 = vld [vmem:[#allocation2 + $0x2c] sm:$0x1]
        %v1335 = vld [vmem:[#allocation2 + $0x30] sm:$0xe]
        %v1336 = vld [vmem:[#allocation2 + $0x34] sm:$0xf]
        %v1337 = vld [vmem:[#allocation2 + $0x38] sm:$0x1]
        %v1338 = vld [vmem:[#allocation2 + $0x3c] sm:$0xe]
        %v1339 = vld [vmem:[#allocation2 + $0x40] sm:$0xf]
        %v1340 = vld [vmem:[#allocation2 + $0x44] sm:$0x1]
        %v1341 = vld [vmem:[#allocation2 + $0x48] sm:$0xe]
        %v1342 = vld [vmem:[#allocation2 + $0x4c] sm:$0xf]
        %v1343 = vld [vmem:[#allocation2 + $0x50] sm:$0x1]
        %v1344 = vld [vmem:[#allocation2 + $0x54] sm:$0xe]
        %v1345 = vld [vmem:[#allocation2 + $0x58] sm:$0xf]
        %v1346 = vld [vmem:[#allocation2 + $0x5c] sm:$0x1]
        %v1347 = vld [vmem:[#allocation2 + $0x60] sm:$0xe]
        %v1348 = vld [vmem:[#allocation2 + $0x64] sm:$0xf]
        %v1349 = vld [vmem:[#allocation2 + $0x68] sm:$0x1]
        %v1350 = vld [vmem:[#allocation2 + $0x6c] sm:$0xe]
        %v1351 = vld [vmem:[#allocation2 + $0x70] sm:$0xf]
        %v1352 = vld [vmem:[#allocation2 + $0x74] sm:$0x1]
        %v1383 = vunpack.c.l.b16 %v1323
        %v1384 = vunpack.c.l.b16 %v1324
        %v1385 = vunpack.c.l.b16 %v1325
        %v1386 = vunpack.c.l.b16 %v1326
        %v1387 = vunpack.c.l.b16 %v1327
        %v1388 = vunpack.c.l.b16 %v1328
        %v1389 = vunpack.c.l.b16 %v1329
        %v1390 = vunpack.c.l.b16 %v1330
        %v1391 = vunpack.c.l.b16 %v1331
        %v1392 = vunpack.c.l.b16 %v1332
        %v1393 = vunpack.c.l.b16 %v1333
        %v1394 = vunpack.c.l.b16 %v1334
        %v1395 = vunpack.c.l.b16 %v1335
        %v1396 = vunpack.c.l.b16 %v1336
        %v1397 = vunpack.c.l.b16 %v1337
        %v1398 = vunpack.c.l.b16 %v1338
        %v1399 = vunpack.c.l.b16 %v1339
        %v1400 = vunpack.c.l.b16 %v1340
        %v1401 = vunpack.c.l.b16 %v1341
        %v1402 = vunpack.c.l.b16 %v1342
        %v1403 = vunpack.c.l.b16 %v1343
        %v1404 = vunpack.c.l.b16 %v1344
        %v1405 = vunpack.c.l.b16 %v1345
        %v1406 = vunpack.c.l.b16 %v1346
        %v1407 = vunpack.c.l.b16 %v1347
        %v1408 = vunpack.c.l.b16 %v1348
        %v1409 = vunpack.c.l.b16 %v1349
        %v1410 = vunpack.c.l.b16 %v1350
        %v1411 = vunpack.c.l.b16 %v1351
        %v1412 = vunpack.c.l.b16 %v1352
        %v1413 = vpack.c.b16 %v1384, %v1383
        %v1414 = vpack.c.b16 %v1385, %v1385
        %v1415 = vpack.c.b16 %v1387, %v1386
        %v1416 = vpack.c.b16 %v1388, %v1388
        %v1417 = vpack.c.b16 %v1390, %v1389
        %v1418 = vpack.c.b16 %v1391, %v1391
        %v1419 = vpack.c.b16 %v1393, %v1392
        %v1420 = vpack.c.b16 %v1394, %v1394
        %v1421 = vpack.c.b16 %v1396, %v1395
        %v1422 = vpack.c.b16 %v1397, %v1397
        %v1423 = vpack.c.b16 %v1399, %v1398
        %v1424 = vpack.c.b16 %v1400, %v1400
        %v1425 = vpack.c.b16 %v1402, %v1401
        %v1426 = vpack.c.b16 %v1403, %v1403
        %v1427 = vpack.c.b16 %v1405, %v1404
        %v1428 = vpack.c.b16 %v1406, %v1406
        %v1429 = vpack.c.b16 %v1408, %v1407
        %v1430 = vpack.c.b16 %v1409, %v1409
        %v1431 = vpack.c.b16 %v1411, %v1410
        %v1432 = vpack.c.b16 %v1412, %v1412
        %vm1433 = vcmask 1046528
        %v1434 = vrot.slane %v1413, 1
        %v1435 = vrot.slane %v1414, 1
        %v1436 = vsel %vm1433, %v1434, %v1435
        %v1437 = vrot.slane %v1415, 1
        %v1438 = vrot.slane %v1416, 1
        %v1439 = vsel %vm1433, %v1437, %v1438
        %v1440 = vrot.slane %v1417, 1
        %v1441 = vrot.slane %v1418, 1
        %v1442 = vsel %vm1433, %v1440, %v1441
        %v1443 = vrot.slane %v1419, 1
        %v1444 = vrot.slane %v1420, 1
        %v1445 = vsel %vm1433, %v1443, %v1444
        %v1446 = vrot.slane %v1421, 1
        %v1447 = vrot.slane %v1422, 1
        %v1448 = vsel %vm1433, %v1446, %v1447
        %v1449 = vrot.slane %v1423, 1
        %v1450 = vrot.slane %v1424, 1
        %v1451 = vsel %vm1433, %v1449, %v1450
        %v1452 = vrot.slane %v1425, 1
        %v1453 = vrot.slane %v1426, 1
        %v1454 = vsel %vm1433, %v1452, %v1453
        %v1455 = vrot.slane %v1427, 1
        %v1456 = vrot.slane %v1428, 1
        %v1457 = vsel %vm1433, %v1455, %v1456
        %v1458 = vrot.slane %v1429, 1
        %v1459 = vrot.slane %v1430, 1
        %v1460 = vsel %vm1433, %v1458, %v1459
        %v1461 = vrot.slane %v1431, 1
        %v1462 = vrot.slane %v1432, 1
        %v1463 = vsel %vm1433, %v1461, %v1462
        %1474 = vst [vmem:[#allocation3 + $0x10] sm:$0xff] %v1436
        %1475 = vst [vmem:[#allocation3 + $0x28] sm:$0xff] %v1439
        %1476 = vst [vmem:[#allocation3 + $0x40] sm:$0xff] %v1442
        %1477 = vst [vmem:[#allocation3 + $0x58] sm:$0xff] %v1445
        %1478 = vst [vmem:[#allocation3 + $0x70] sm:$0xff] %v1448
        %1479 = vst [vmem:[#allocation3 + $0x88] sm:$0xff] %v1451
        %1480 = vst [vmem:[#allocation3 + $0xa0] sm:$0xff] %v1454
        %1481 = vst [vmem:[#allocation3 + $0xb8] sm:$0xff] %v1457
        %1482 = vst [vmem:[#allocation3 + $0xd0] sm:$0xff] %v1460
        %1483 = vst [vmem:[#allocation3 + $0xe8] sm:$0xff] %v1463
        %v1484 = vld [vmem:[#allocation3] sm:$0xff]
        %v1485 = vld [vmem:[#allocation3 + $0x8] sm:$0xff]
        %v1486 = vld [vmem:[#allocation3 + $0x10] sm:$0xff]
        %v1487 = vld [vmem:[#allocation3 + $0x18] sm:$0xff]
        %v1488 = vld [vmem:[#allocation3 + $0x20] sm:$0xff]
        %v1489 = vld [vmem:[#allocation3 + $0x28] sm:$0xff]
        %v1490 = vld [vmem:[#allocation3 + $0x30] sm:$0xff]
        %v1491 = vld [vmem:[#allocation3 + $0x38] sm:$0xff]
        %v1492 = vld [vmem:[#allocation3 + $0x40] sm:$0xff]
        %v1493 = vld [vmem:[#allocation3 + $0x48] sm:$0xff]
        %v1494 = vld [vmem:[#allocation3 + $0x50] sm:$0xff]
        %v1495 = vld [vmem:[#allocation3 + $0x58] sm:$0xff]
        %v1496 = vld [vmem:[#allocation3 + $0x60] sm:$0xff]
        %v1497 = vld [vmem:[#allocation3 + $0x68] sm:$0xff]
        %v1498 = vld [vmem:[#allocation3 + $0x70] sm:$0xff]
        %v1499 = vld [vmem:[#allocation3 + $0x78] sm:$0xff]
        %v1500 = vld [vmem:[#allocation3 + $0x80] sm:$0xff]
        %v1501 = vld [vmem:[#allocation3 + $0x88] sm:$0xff]
        %v1502 = vld [vmem:[#allocation3 + $0x90] sm:$0xff]
        %v1503 = vld [vmem:[#allocation3 + $0x98] sm:$0xff]
        %v1504 = vld [vmem:[#allocation3 + $0xa0] sm:$0xff]
        %v1505 = vld [vmem:[#allocation3 + $0xa8] sm:$0xff]
        %v1506 = vld [vmem:[#allocation3 + $0xb0] sm:$0xff]
        %v1507 = vld [vmem:[#allocation3 + $0xb8] sm:$0xff]
        %v1508 = vld [vmem:[#allocation9] sm:$0xf]
        %v1509 = vld [vmem:[#allocation9 + $0x4] sm:$0xf]
        %v1510 = vld [vmem:[#allocation9 + $0x8] sm:$0xf]
        %v1511 = vld [vmem:[#allocation9 + $0xc] sm:$0xf]
        %v1512 = vld [vmem:[#allocation9 + $0x10] sm:$0xf]
        %v1513 = vld [vmem:[#allocation9 + $0x14] sm:$0xf]
        %v1514 = vld [vmem:[#allocation9 + $0x18] sm:$0xf]
        %v1515 = vld [vmem:[#allocation9 + $0x1c] sm:$0xf]
        %v1516 = vld [vmem:[#allocation9 + $0x20] sm:$0xf]
        %v1517 = vld [vmem:[#allocation9 + $0x24] sm:$0xf]
        %v1518 = vld [vmem:[#allocation9 + $0x28] sm:$0xf]
        %v1519 = vld [vmem:[#allocation9 + $0x2c] sm:$0xf]
        %v1520 = vld [vmem:[#allocation9 + $0x30] sm:$0xf]
        %v1521 = vld [vmem:[#allocation9 + $0x34] sm:$0xf]
        %v1522 = vld [vmem:[#allocation9 + $0x38] sm:$0xf]
        %v1523 = vld [vmem:[#allocation9 + $0x3c] sm:$0xf]
        %v1524 = vld [vmem:[#allocation9 + $0x40] sm:$0xf]
        %v1525 = vld [vmem:[#allocation9 + $0x44] sm:$0xf]
        %v1526 = vld [vmem:[#allocation9 + $0x48] sm:$0xf]
        %v1527 = vld [vmem:[#allocation9 + $0x4c] sm:$0xf]
        %v1528 = vld [vmem:[#allocation9 + $0x50] sm:$0xf]
        %v1529 = vld [vmem:[#allocation9 + $0x54] sm:$0xf]
        %v1530 = vld [vmem:[#allocation9 + $0x58] sm:$0xf]
        %v1531 = vld [vmem:[#allocation9 + $0x5c] sm:$0xf]
        %v1532 = vld [vmem:[#allocation9 + $0x60] sm:$0xf]
        %v1533 = vld [vmem:[#allocation9 + $0x64] sm:$0xf]
        %v1534 = vld [vmem:[#allocation9 + $0x68] sm:$0xf]
        %v1535 = vld [vmem:[#allocation9 + $0x6c] sm:$0xf]
        %v1536 = vld [vmem:[#allocation9 + $0x70] sm:$0xf]
        %v1537 = vld [vmem:[#allocation9 + $0x74] sm:$0xf]
        %v1538 = vld [vmem:[#allocation9 + $0x78] sm:$0xf]
        %v1539 = vld [vmem:[#allocation9 + $0x7c] sm:$0xf]
        %v1540 = vld [vmem:[#allocation9 + $0x80] sm:$0xf]
        %v1541 = vld [vmem:[#allocation9 + $0x84] sm:$0xf]
        %v1542 = vld [vmem:[#allocation9 + $0x88] sm:$0xf]
        %v1543 = vld [vmem:[#allocation9 + $0x8c] sm:$0xf]
        %v1544 = vld [vmem:[#allocation9 + $0x90] sm:$0xf]
        %v1545 = vld [vmem:[#allocation9 + $0x94] sm:$0xf]
        %v1546 = vld [vmem:[#allocation9 + $0x98] sm:$0xf]
        %v1547 = vld [vmem:[#allocation9 + $0x9c] sm:$0xf]
        %v1548 = vld [vmem:[#allocation9 + $0xa0] sm:$0xf]
        %v1549 = vld [vmem:[#allocation9 + $0xa4] sm:$0xf]
        %v1550 = vld [vmem:[#allocation9 + $0xa8] sm:$0xf]
        %v1551 = vld [vmem:[#allocation9 + $0xac] sm:$0xf]
        %v1552 = vld [vmem:[#allocation9 + $0xb0] sm:$0xf]
        %v1553 = vld [vmem:[#allocation9 + $0xb4] sm:$0xf]
        %v1554 = vld [vmem:[#allocation9 + $0xb8] sm:$0xf]
        %v1555 = vld [vmem:[#allocation9 + $0xbc] sm:$0xf]
        %v1604 = vunpack.c.l.b16 %v1508
        %v1605 = vunpack.c.l.b16 %v1509
        %v1606 = vunpack.c.l.b16 %v1510
        %v1607 = vunpack.c.l.b16 %v1511
        %v1608 = vunpack.c.l.b16 %v1512
        %v1609 = vunpack.c.l.b16 %v1513
        %v1610 = vunpack.c.l.b16 %v1514
        %v1611 = vunpack.c.l.b16 %v1515
        %v1612 = vunpack.c.l.b16 %v1516
        %v1613 = vunpack.c.l.b16 %v1517
        %v1614 = vunpack.c.l.b16 %v1518
        %v1615 = vunpack.c.l.b16 %v1519
        %v1616 = vunpack.c.l.b16 %v1520
        %v1617 = vunpack.c.l.b16 %v1521
        %v1618 = vunpack.c.l.b16 %v1522
        %v1619 = vunpack.c.l.b16 %v1523
        %v1620 = vunpack.c.l.b16 %v1524
        %v1621 = vunpack.c.l.b16 %v1525
        %v1622 = vunpack.c.l.b16 %v1526
        %v1623 = vunpack.c.l.b16 %v1527
        %v1624 = vunpack.c.l.b16 %v1528
        %v1625 = vunpack.c.l.b16 %v1529
        %v1626 = vunpack.c.l.b16 %v1530
        %v1627 = vunpack.c.l.b16 %v1531
        %v1628 = vunpack.c.l.b16 %v1532
        %v1629 = vunpack.c.l.b16 %v1533
        %v1630 = vunpack.c.l.b16 %v1534
        %v1631 = vunpack.c.l.b16 %v1535
        %v1632 = vunpack.c.l.b16 %v1536
        %v1633 = vunpack.c.l.b16 %v1537
        %v1634 = vunpack.c.l.b16 %v1538
        %v1635 = vunpack.c.l.b16 %v1539
        %v1636 = vunpack.c.l.b16 %v1540
        %v1637 = vunpack.c.l.b16 %v1541
        %v1638 = vunpack.c.l.b16 %v1542
        %v1639 = vunpack.c.l.b16 %v1543
        %v1640 = vunpack.c.l.b16 %v1544
        %v1641 = vunpack.c.l.b16 %v1545
        %v1642 = vunpack.c.l.b16 %v1546
        %v1643 = vunpack.c.l.b16 %v1547
        %v1644 = vunpack.c.l.b16 %v1548
        %v1645 = vunpack.c.l.b16 %v1549
        %v1646 = vunpack.c.l.b16 %v1550
        %v1647 = vunpack.c.l.b16 %v1551
        %v1648 = vunpack.c.l.b16 %v1552
        %v1649 = vunpack.c.l.b16 %v1553
        %v1650 = vunpack.c.l.b16 %v1554
        %v1651 = vunpack.c.l.b16 %v1555
        %v1652 = vpack.c.b16 %v1605, %v1604
        %v1653 = vpack.c.b16 %v1607, %v1606
        %v1654 = vpack.c.b16 %v1609, %v1608
        %v1655 = vpack.c.b16 %v1611, %v1610
        %v1656 = vpack.c.b16 %v1613, %v1612
        %v1657 = vpack.c.b16 %v1615, %v1614
        %v1658 = vpack.c.b16 %v1617, %v1616
        %v1659 = vpack.c.b16 %v1619, %v1618
        %v1660 = vpack.c.b16 %v1621, %v1620
        %v1661 = vpack.c.b16 %v1623, %v1622
        %v1662 = vpack.c.b16 %v1625, %v1624
        %v1663 = vpack.c.b16 %v1627, %v1626
        %v1664 = vpack.c.b16 %v1629, %v1628
        %v1665 = vpack.c.b16 %v1631, %v1630
        %v1666 = vpack.c.b16 %v1633, %v1632
        %v1667 = vpack.c.b16 %v1635, %v1634
        %v1668 = vpack.c.b16 %v1637, %v1636
        %v1669 = vpack.c.b16 %v1639, %v1638
        %v1670 = vpack.c.b16 %v1641, %v1640
        %v1671 = vpack.c.b16 %v1643, %v1642
        %v1672 = vpack.c.b16 %v1645, %v1644
        %v1673 = vpack.c.b16 %v1647, %v1646
        %v1674 = vpack.c.b16 %v1649, %v1648
        %v1675 = vpack.c.b16 %v1651, %v1650
        %1700 = vmatprep.subr.bf16.mxu0 0
        %1701 = vmatpush1.bf16.msra.mxu0 %v1652
        %1702 = vmatprep.subr.bf16.mxu0 0
        %1703 = vmatpush1.bf16.msra.mxu0 %v1653
        %1704 = vmatprep.subr.bf16.mxu0 0
        %1705 = vmatpush1.bf16.msra.mxu0 %v1654
        %1706 = vmatprep.subr.bf16.mxu0 0
        %1707 = vmatpush1.bf16.msra.mxu0 %v1655
        %1708 = vmatprep.subr.bf16.mxu0 0
        %1709 = vmatpush1.bf16.msra.mxu0 %v1656
        %1710 = vmatprep.subr.bf16.mxu0 0
        %1711 = vmatpush1.bf16.msra.mxu0 %v1657
        %1712 = vmatprep.subr.bf16.mxu0 0
        %1713 = vmatpush1.bf16.msra.mxu0 %v1658
        %1714 = vmatprep.subr.bf16.mxu0 0
        %1715 = vmatpush1.bf16.msra.mxu0 %v1659
        %1716 = vmatprep.subr.bf16.mxu0 0
        %1717 = vmatpush1.bf16.msra.mxu0 %v1660
        %1718 = vmatprep.subr.bf16.mxu0 0
        %1719 = vmatpush1.bf16.msra.mxu0 %v1661
        %1720 = vmatprep.subr.bf16.mxu0 0
        %1721 = vmatpush1.bf16.msra.mxu0 %v1662
        %1722 = vmatprep.subr.bf16.mxu0 0
        %1723 = vmatpush1.bf16.msra.mxu0 %v1663
        %1724 = vmatprep.subr.bf16.mxu0 0
        %1725 = vmatpush1.bf16.msra.mxu0 %v1664
        %1726 = vmatprep.subr.bf16.mxu0 0
        %1727 = vmatpush1.bf16.msra.mxu0 %v1665
        %1728 = vmatprep.subr.bf16.mxu0 0
        %1729 = vmatpush1.bf16.msra.mxu0 %v1666
        %1730 = vmatprep.subr.bf16.mxu0 0
        %1731 = vmatpush1.bf16.msra.mxu0 %v1667
        %1732 = vmatprep.mubr.bf16.mxu0 %v1485
        %1733 = vmatmul.mubr.bf16.gmra.mrb[0].mxu0 %v1484
        %v1734 = vpop.f32.mrb[0].mxu0
        %v1735 = vadd.f32 0.0, %v1734
        %v1736 = vpop.f32.mrb[0].mxu0
        %v1737 = vpop.f32.mrb[0].mxu0
        %v1738 = vadd.f32 0.0, %v1737
        %v1739 = vpop.f32.mrb[0].mxu0
        %1740 = vmatprep.mubr.bf16.mxu0 %v1488
        %1741 = vmatmul.mubr.bf16.gmra.mrb[0].mxu0 %v1487
        %v1742 = vpop.f32.mrb[0].mxu0
        %v1743 = vadd.f32 0.0, %v1742
        %v1744 = vpop.f32.mrb[0].mxu0
        %v1745 = vpop.f32.mrb[0].mxu0
        %v1746 = vadd.f32 0.0, %v1745
        %v1747 = vpop.f32.mrb[0].mxu0
        %1748 = vmatprep.mubr.bf16.mxu0 %v1491
        %1749 = vmatmul.mubr.bf16.gmra.mrb[0].mxu0 %v1490
        %v1750 = vpop.f32.mrb[0].mxu0
        %v1751 = vadd.f32 0.0, %v1750
        %v1752 = vpop.f32.mrb[0].mxu0
        %v1753 = vpop.f32.mrb[0].mxu0
        %v1754 = vadd.f32 0.0, %v1753
        %v1755 = vpop.f32.mrb[0].mxu0
        %1756 = vmatprep.mubr.bf16.mxu0 %v1494
        %1757 = vmatmul.mubr.bf16.gmra.mrb[0].mxu0 %v1493
        %v1758 = vpop.f32.mrb[0].mxu0
        %v1759 = vadd.f32 0.0, %v1758
        %v1760 = vpop.f32.mrb[0].mxu0
        %v1761 = vpop.f32.mrb[0].mxu0
        %v1762 = vadd.f32 0.0, %v1761
        %v1763 = vpop.f32.mrb[0].mxu0
        %1764 = vmatprep.mubr.bf16.mxu0 %v1497
        %1765 = vmatmul.mubr.bf16.gmra.mrb[0].mxu0 %v1496
        %v1766 = vpop.f32.mrb[0].mxu0
        %v1767 = vadd.f32 0.0, %v1766
        %v1768 = vpop.f32.mrb[0].mxu0
        %v1769 = vpop.f32.mrb[0].mxu0
        %v1770 = vadd.f32 0.0, %v1769
        %v1771 = vpop.f32.mrb[0].mxu0
        %1772 = vmatprep.mubr.bf16.mxu0 %v1500
        %1773 = vmatmul.mubr.bf16.gmra.mrb[0].mxu0 %v1499
        %v1774 = vpop.f32.mrb[0].mxu0
        %v1775 = vadd.f32 0.0, %v1774
        %v1776 = vpop.f32.mrb[0].mxu0
        %v1777 = vpop.f32.mrb[0].mxu0
        %v1778 = vadd.f32 0.0, %v1777
        %v1779 = vpop.f32.mrb[0].mxu0
        %1780 = vmatprep.mubr.bf16.mxu0 %v1503
        %1781 = vmatmul.mubr.bf16.gmra.mrb[0].mxu0 %v1502
        %v1782 = vpop.f32.mrb[0].mxu0
        %v1783 = vadd.f32 0.0, %v1782
        %v1784 = vpop.f32.mrb[0].mxu0
        %v1785 = vpop.f32.mrb[0].mxu0
        %v1786 = vadd.f32 0.0, %v1785
        %v1787 = vpop.f32.mrb[0].mxu0
        %1788 = vmatprep.mubr.bf16.mxu0 %v1506
        %1789 = vmatmul.mubr.bf16.gmra.mrb[0].mxu0 %v1505
        %v1790 = vpop.f32.mrb[0].mxu0
        %v1791 = vadd.f32 0.0, %v1790
        %v1792 = vpop.f32.mrb[0].mxu0
        %v1793 = vpop.f32.mrb[0].mxu0
        %v1794 = vadd.f32 0.0, %v1793
        %v1795 = vpop.f32.mrb[0].mxu0
        %1796 = vdwg.mxu0
        %1797 = vmatprep.subr.bf16.mxu0 0
        %1798 = vmatpush1.bf16.msra.mxu0 %v1668
        %1799 = vmatprep.subr.bf16.mxu0 0
        %1800 = vmatpush1.bf16.msra.mxu0 %v1669
        %1801 = vmatprep.subr.bf16.mxu0 0
        %1802 = vmatpush1.bf16.msra.mxu0 %v1670
        %1803 = vmatprep.subr.bf16.mxu0 0
        %1804 = vmatpush1.bf16.msra.mxu0 %v1671
        %1805 = vmatprep.subr.bf16.mxu0 0
        %1806 = vmatpush1.bf16.msra.mxu0 %v1672
        %1807 = vmatprep.subr.bf16.mxu0 0
        %1808 = vmatpush1.bf16.msra.mxu0 %v1673
        %1809 = vmatprep.subr.bf16.mxu0 0
        %1810 = vmatpush1.bf16.msra.mxu0 %v1674
        %1811 = vmatprep.subr.bf16.mxu0 0
        %1812 = vmatpush1.bf16.msra.mxu0 %v1675
        %1813 = vmatprep.subr.bf16.mxu0 0
        %1814 = vmatpush1.bf16.msra.mxu0 0
        %1815 = vmatprep.subr.bf16.mxu0 0
        %1816 = vmatpush1.bf16.msra.mxu0 0
        %1817 = vmatprep.subr.bf16.mxu0 0
        %1818 = vmatpush1.bf16.msra.mxu0 0
        %1819 = vmatprep.subr.bf16.mxu0 0
        %1820 = vmatpush1.bf16.msra.mxu0 0
        %1821 = vmatprep.subr.bf16.mxu0 0
        %1822 = vmatpush1.bf16.msra.mxu0 0
        %1823 = vmatprep.subr.bf16.mxu0 0
        %1824 = vmatpush1.bf16.msra.mxu0 0
        %1825 = vmatprep.subr.bf16.mxu0 0
        %1826 = vmatpush1.bf16.msra.mxu0 0
        %1827 = vmatprep.subr.bf16.mxu0 0
        %1828 = vmatpush1.bf16.msra.mxu0 0
        %1829 = vmatprep.mubr.bf16.mxu0 0
        %1830 = vmatmul.mubr.bf16.gmra.mrb[0].mxu0 %v1486
        %v1831 = vpop.f32.mrb[0].mxu0
        %v1832 = vadd.f32 %v1735, %v1831
        %v1833 = vpop.f32.mrb[0].mxu0
        %v1834 = vpop.f32.mrb[0].mxu0
        %v1835 = vadd.f32 %v1738, %v1834
        %v1836 = vpop.f32.mrb[0].mxu0
        %1837 = vmatprep.mubr.bf16.mxu0 0
        %1838 = vmatmul.mubr.bf16.gmra.mrb[0].mxu0 %v1489
        %v1839 = vpop.f32.mrb[0].mxu0
        %v1840 = vadd.f32 %v1743, %v1839
        %v1841 = vpop.f32.mrb[0].mxu0
        %v1842 = vpop.f32.mrb[0].mxu0
        %v1843 = vadd.f32 %v1746, %v1842
        %v1844 = vpop.f32.mrb[0].mxu0
        %1845 = vmatprep.mubr.bf16.mxu0 0
        %1846 = vmatmul.mubr.bf16.gmra.mrb[0].mxu0 %v1492
        %v1847 = vpop.f32.mrb[0].mxu0
        %v1848 = vadd.f32 %v1751, %v1847
        %v1849 = vpop.f32.mrb[0].mxu0
        %v1850 = vpop.f32.mrb[0].mxu0
        %v1851 = vadd.f32 %v1754, %v1850
        %v1852 = vpop.f32.mrb[0].mxu0
        %1853 = vmatprep.mubr.bf16.mxu0 0
        %1854 = vmatmul.mubr.bf16.gmra.mrb[0].mxu0 %v1495
        %v1855 = vpop.f32.mrb[0].mxu0
        %v1856 = vadd.f32 %v1759, %v1855
        %v1857 = vpop.f32.mrb[0].mxu0
        %v1858 = vpop.f32.mrb[0].mxu0
        %v1859 = vadd.f32 %v1762, %v1858
        %v1860 = vpop.f32.mrb[0].mxu0
        %1861 = vmatprep.mubr.bf16.mxu0 0
        %1862 = vmatmul.mubr.bf16.gmra.mrb[0].mxu0 %v1498
        %v1863 = vpop.f32.mrb[0].mxu0
        %v1864 = vadd.f32 %v1767, %v1863
        %v1865 = vpop.f32.mrb[0].mxu0
        %v1866 = vpop.f32.mrb[0].mxu0
        %v1867 = vadd.f32 %v1770, %v1866
        %v1868 = vpop.f32.mrb[0].mxu0
        %1869 = vmatprep.mubr.bf16.mxu0 0
        %1870 = vmatmul.mubr.bf16.gmra.mrb[0].mxu0 %v1501
        %v1871 = vpop.f32.mrb[0].mxu0
        %v1872 = vadd.f32 %v1775, %v1871
        %v1873 = vpop.f32.mrb[0].mxu0
        %v1874 = vpop.f32.mrb[0].mxu0
        %v1875 = vadd.f32 %v1778, %v1874
        %v1876 = vpop.f32.mrb[0].mxu0
        %1877 = vmatprep.mubr.bf16.mxu0 0
        %1878 = vmatmul.mubr.bf16.gmra.mrb[0].mxu0 %v1504
        %v1879 = vpop.f32.mrb[0].mxu0
        %v1880 = vadd.f32 %v1783, %v1879
        %v1881 = vpop.f32.mrb[0].mxu0
        %v1882 = vpop.f32.mrb[0].mxu0
        %v1883 = vadd.f32 %v1786, %v1882
        %v1884 = vpop.f32.mrb[0].mxu0
        %1885 = vmatprep.mubr.bf16.mxu0 0
        %1886 = vmatmul.mubr.bf16.gmra.mrb[0].mxu0 %v1507
        %v1887 = vpop.f32.mrb[0].mxu0
        %v1888 = vadd.f32 %v1791, %v1887
        %v1889 = vpop.f32.mrb[0].mxu0
        %v1890 = vpop.f32.mrb[0].mxu0
        %v1891 = vadd.f32 %v1794, %v1890
        %v1892 = vpop.f32.mrb[0].mxu0
        %1893 = vdwg.mxu0
        %v1894 = vadd.f32 %v464, %v1832
        %v1895 = vadd.f32 %v468, %v1835
        %v1896 = vadd.f32 %v474, %v1840
        %v1897 = vadd.f32 %v478, %v1843
        %v1898 = vadd.f32 %v484, %v1848
        %v1899 = vadd.f32 %v488, %v1851
        %v1900 = vadd.f32 %v494, %v1856
        %v1901 = vadd.f32 %v498, %v1859
        %v1902 = vadd.f32 %v504, %v1864
        %v1903 = vadd.f32 %v508, %v1867
        %v1904 = vadd.f32 %v514, %v1872
        %v1905 = vadd.f32 %v518, %v1875
        %v1906 = vadd.f32 %v524, %v1880
        %v1907 = vadd.f32 %v528, %v1883
        %v1908 = vadd.f32 %v534, %v1888
        %v1909 = vadd.f32 %v538, %v1891
        %s1910 = scalar_lea.vmem [#allocation3], 24
        %v1911 = vld [vmem:[%s1910] sm:$0xff]
        %v1912 = vld [vmem:[%s1910 + $0x8] sm:$0xff]
        %v1913 = vld [vmem:[%s1910 + $0x10] sm:$0xff]
        %v1914 = vld [vmem:[%s1910 + $0x18] sm:$0xff]
        %v1915 = vld [vmem:[%s1910 + $0x20] sm:$0xff]
        %v1916 = vld [vmem:[%s1910 + $0x28] sm:$0xff]
        %v1917 = vld [vmem:[%s1910 + $0x30] sm:$0xff]
        %v1918 = vld [vmem:[%s1910 + $0x38] sm:$0xff]
        %v1919 = vld [vmem:[%s1910 + $0x40] sm:$0xff]
        %v1920 = vld [vmem:[%s1910 + $0x48] sm:$0xff]
        %v1921 = vld [vmem:[%s1910 + $0x50] sm:$0xff]
        %v1922 = vld [vmem:[%s1910 + $0x58] sm:$0xff]
        %v1923 = vld [vmem:[%s1910 + $0x60] sm:$0xff]
        %v1924 = vld [vmem:[%s1910 + $0x68] sm:$0xff]
        %v1925 = vld [vmem:[%s1910 + $0x70] sm:$0xff]
        %v1926 = vld [vmem:[%s1910 + $0x78] sm:$0xff]
        %v1927 = vld [vmem:[%s1910 + $0x80] sm:$0xff]
        %v1928 = vld [vmem:[%s1910 + $0x88] sm:$0xff]
        %v1929 = vld [vmem:[%s1910 + $0x90] sm:$0xff]
        %v1930 = vld [vmem:[%s1910 + $0x98] sm:$0xff]
        %v1931 = vld [vmem:[%s1910 + $0xa0] sm:$0xff]
        %v1932 = vld [vmem:[%s1910 + $0xa8] sm:$0xff]
        %v1933 = vld [vmem:[%s1910 + $0xb0] sm:$0xff]
        %v1934 = vld [vmem:[%s1910 + $0xb8] sm:$0xff]
        %s1935 = scalar_lea.vmem [#allocation9], 192
        %v1936 = vld [vmem:[%s1935] sm:$0xf]
        %v1937 = vld [vmem:[%s1935 + $0x4] sm:$0xf]
        %v1938 = vld [vmem:[%s1935 + $0x8] sm:$0xf]
        %v1939 = vld [vmem:[%s1935 + $0xc] sm:$0xf]
        %v1940 = vld [vmem:[%s1935 + $0x10] sm:$0xf]
        %v1941 = vld [vmem:[%s1935 + $0x14] sm:$0xf]
        %v1942 = vld [vmem:[%s1935 + $0x18] sm:$0xf]
        %v1943 = vld [vmem:[%s1935 + $0x1c] sm:$0xf]
        %v1944 = vld [vmem:[%s1935 + $0x20] sm:$0xf]
        %v1945 = vld [vmem:[%s1935 + $0x24] sm:$0xf]
        %v1946 = vld [vmem:[%s1935 + $0x28] sm:$0xf]
        %v1947 = vld [vmem:[%s1935 + $0x2c] sm:$0xf]
        %v1948 = vld [vmem:[%s1935 + $0x30] sm:$0xf]
        %v1949 = vld [vmem:[%s1935 + $0x34] sm:$0xf]
        %v1950 = vld [vmem:[%s1935 + $0x38] sm:$0xf]
        %v1951 = vld [vmem:[%s1935 + $0x3c] sm:$0xf]
        %v1952 = vld [vmem:[%s1935 + $0x40] sm:$0xf]
        %v1953 = vld [vmem:[%s1935 + $0x44] sm:$0xf]
        %v1954 = vld [vmem:[%s1935 + $0x48] sm:$0xf]
        %v1955 = vld [vmem:[%s1935 + $0x4c] sm:$0xf]
        %v1956 = vld [vmem:[%s1935 + $0x50] sm:$0xf]
        %v1957 = vld [vmem:[%s1935 + $0x54] sm:$0xf]
        %v1958 = vld [vmem:[%s1935 + $0x58] sm:$0xf]
        %v1959 = vld [vmem:[%s1935 + $0x5c] sm:$0xf]
        %v1960 = vld [vmem:[%s1935 + $0x60] sm:$0xf]
        %v1961 = vld [vmem:[%s1935 + $0x64] sm:$0xf]
        %v1962 = vld [vmem:[%s1935 + $0x68] sm:$0xf]
        %v1963 = vld [vmem:[%s1935 + $0x6c] sm:$0xf]
        %v1964 = vld [vmem:[%s1935 + $0x70] sm:$0xf]
        %v1965 = vld [vmem:[%s1935 + $0x74] sm:$0xf]
        %v1966 = vld [vmem:[%s1935 + $0x78] sm:$0xf]
        %v1967 = vld [vmem:[%s1935 + $0x7c] sm:$0xf]
        %v1968 = vld [vmem:[%s1935 + $0x80] sm:$0xf]
        %v1969 = vld [vmem:[%s1935 + $0x84] sm:$0xf]
        %v1970 = vld [vmem:[%s1935 + $0x88] sm:$0xf]
        %v1971 = vld [vmem:[%s1935 + $0x8c] sm:$0xf]
        %v1972 = vld [vmem:[%s1935 + $0x90] sm:$0xf]
        %v1973 = vld [vmem:[%s1935 + $0x94] sm:$0xf]
        %v1974 = vld [vmem:[%s1935 + $0x98] sm:$0xf]
        %v1975 = vld [vmem:[%s1935 + $0x9c] sm:$0xf]
        %v1976 = vld [vmem:[%s1935 + $0xa0] sm:$0xf]
        %v1977 = vld [vmem:[%s1935 + $0xa4] sm:$0xf]
        %v1978 = vld [vmem:[%s1935 + $0xa8] sm:$0xf]
        %v1979 = vld [vmem:[%s1935 + $0xac] sm:$0xf]
        %v1980 = vld [vmem:[%s1935 + $0xb0] sm:$0xf]
        %v1981 = vld [vmem:[%s1935 + $0xb4] sm:$0xf]
        %v1982 = vld [vmem:[%s1935 + $0xb8] sm:$0xf]
        %v1983 = vld [vmem:[%s1935 + $0xbc] sm:$0xf]
        %v2032 = vunpack.c.l.b16 %v1936
        %v2033 = vunpack.c.l.b16 %v1937
        %v2034 = vunpack.c.l.b16 %v1938
        %v2035 = vunpack.c.l.b16 %v1939
        %v2036 = vunpack.c.l.b16 %v1940
        %v2037 = vunpack.c.l.b16 %v1941
        %v2038 = vunpack.c.l.b16 %v1942
        %v2039 = vunpack.c.l.b16 %v1943
        %v2040 = vunpack.c.l.b16 %v1944
        %v2041 = vunpack.c.l.b16 %v1945
        %v2042 = vunpack.c.l.b16 %v1946
        %v2043 = vunpack.c.l.b16 %v1947
        %v2044 = vunpack.c.l.b16 %v1948
        %v2045 = vunpack.c.l.b16 %v1949
        %v2046 = vunpack.c.l.b16 %v1950
        %v2047 = vunpack.c.l.b16 %v1951
        %v2048 = vunpack.c.l.b16 %v1952
        %v2049 = vunpack.c.l.b16 %v1953
        %v2050 = vunpack.c.l.b16 %v1954
        %v2051 = vunpack.c.l.b16 %v1955
        %v2052 = vunpack.c.l.b16 %v1956
        %v2053 = vunpack.c.l.b16 %v1957
        %v2054 = vunpack.c.l.b16 %v1958
        %v2055 = vunpack.c.l.b16 %v1959
        %v2056 = vunpack.c.l.b16 %v1960
        %v2057 = vunpack.c.l.b16 %v1961
        %v2058 = vunpack.c.l.b16 %v1962
        %v2059 = vunpack.c.l.b16 %v1963
        %v2060 = vunpack.c.l.b16 %v1964
        %v2061 = vunpack.c.l.b16 %v1965
        %v2062 = vunpack.c.l.b16 %v1966
        %v2063 = vunpack.c.l.b16 %v1967
        %v2064 = vunpack.c.l.b16 %v1968
        %v2065 = vunpack.c.l.b16 %v1969
        %v2066 = vunpack.c.l.b16 %v1970
        %v2067 = vunpack.c.l.b16 %v1971
        %v2068 = vunpack.c.l.b16 %v1972
        %v2069 = vunpack.c.l.b16 %v1973
        %v2070 = vunpack.c.l.b16 %v1974
        %v2071 = vunpack.c.l.b16 %v1975
        %v2072 = vunpack.c.l.b16 %v1976
        %v2073 = vunpack.c.l.b16 %v1977
        %v2074 = vunpack.c.l.b16 %v1978
        %v2075 = vunpack.c.l.b16 %v1979
        %v2076 = vunpack.c.l.b16 %v1980
        %v2077 = vunpack.c.l.b16 %v1981
        %v2078 = vunpack.c.l.b16 %v1982
        %v2079 = vunpack.c.l.b16 %v1983
        %v2080 = vpack.c.b16 %v2033, %v2032
        %v2081 = vpack.c.b16 %v2035, %v2034
        %v2082 = vpack.c.b16 %v2037, %v2036
        %v2083 = vpack.c.b16 %v2039, %v2038
        %v2084 = vpack.c.b16 %v2041, %v2040
        %v2085 = vpack.c.b16 %v2043, %v2042
        %v2086 = vpack.c.b16 %v2045, %v2044
        %v2087 = vpack.c.b16 %v2047, %v2046
        %v2088 = vpack.c.b16 %v2049, %v2048
        %v2089 = vpack.c.b16 %v2051, %v2050
        %v2090 = vpack.c.b16 %v2053, %v2052
        %v2091 = vpack.c.b16 %v2055, %v2054
        %v2092 = vpack.c.b16 %v2057, %v2056
        %v2093 = vpack.c.b16 %v2059, %v2058
        %v2094 = vpack.c.b16 %v2061, %v2060
        %v2095 = vpack.c.b16 %v2063, %v2062
        %v2096 = vpack.c.b16 %v2065, %v2064
        %v2097 = vpack.c.b16 %v2067, %v2066
        %v2098 = vpack.c.b16 %v2069, %v2068
        %v2099 = vpack.c.b16 %v2071, %v2070
        %v2100 = vpack.c.b16 %v2073, %v2072
        %v2101 = vpack.c.b16 %v2075, %v2074
        %v2102 = vpack.c.b16 %v2077, %v2076
        %v2103 = vpack.c.b16 %v2079, %v2078
        %2128 = vmatprep.subr.bf16.mxu0 0
        %2129 = vmatpush1.bf16.msra.mxu0 %v2080
        %2130 = vmatprep.subr.bf16.mxu0 0
        %2131 = vmatpush1.bf16.msra.mxu0 %v2081
        %2132 = vmatprep.subr.bf16.mxu0 0
        %2133 = vmatpush1.bf16.msra.mxu0 %v2082
        %2134 = vmatprep.subr.bf16.mxu0 0
        %2135 = vmatpush1.bf16.msra.mxu0 %v2083
        %2136 = vmatprep.subr.bf16.mxu0 0
        %2137 = vmatpush1.bf16.msra.mxu0 %v2084
        %2138 = vmatprep.subr.bf16.mxu0 0
        %2139 = vmatpush1.bf16.msra.mxu0 %v2085
        %2140 = vmatprep.subr.bf16.mxu0 0
        %2141 = vmatpush1.bf16.msra.mxu0 %v2086
        %2142 = vmatprep.subr.bf16.mxu0 0
        %2143 = vmatpush1.bf16.msra.mxu0 %v2087
        %2144 = vmatprep.subr.bf16.mxu0 0
        %2145 = vmatpush1.bf16.msra.mxu0 %v2088
        %2146 = vmatprep.subr.bf16.mxu0 0
        %2147 = vmatpush1.bf16.msra.mxu0 %v2089
        %2148 = vmatprep.subr.bf16.mxu0 0
        %2149 = vmatpush1.bf16.msra.mxu0 %v2090
        %2150 = vmatprep.subr.bf16.mxu0 0
        %2151 = vmatpush1.bf16.msra.mxu0 %v2091
        %2152 = vmatprep.subr.bf16.mxu0 0
        %2153 = vmatpush1.bf16.msra.mxu0 %v2092
        %2154 = vmatprep.subr.bf16.mxu0 0
        %2155 = vmatpush1.bf16.msra.mxu0 %v2093
        %2156 = vmatprep.subr.bf16.mxu0 0
        %2157 = vmatpush1.bf16.msra.mxu0 %v2094
        %2158 = vmatprep.subr.bf16.mxu0 0
        %2159 = vmatpush1.bf16.msra.mxu0 %v2095
        %2160 = vmatprep.mubr.bf16.mxu0 %v1912
        %2161 = vmatmul.mubr.bf16.gmra.mrb[0].mxu0 %v1911
        %v2162 = vpop.f32.mrb[0].mxu0
        %v2163 = vadd.f32 0.0, %v2162
        %v2164 = vpop.f32.mrb[0].mxu0
        %v2165 = vpop.f32.mrb[0].mxu0
        %v2166 = vadd.f32 0.0, %v2165
        %v2167 = vpop.f32.mrb[0].mxu0
        %2168 = vmatprep.mubr.bf16.mxu0 %v1915
        %2169 = vmatmul.mubr.bf16.gmra.mrb[0].mxu0 %v1914
        %v2170 = vpop.f32.mrb[0].mxu0
        %v2171 = vadd.f32 0.0, %v2170
        %v2172 = vpop.f32.mrb[0].mxu0
        %v2173 = vpop.f32.mrb[0].mxu0
        %v2174 = vadd.f32 0.0, %v2173
        %v2175 = vpop.f32.mrb[0].mxu0
        %2176 = vmatprep.mubr.bf16.mxu0 %v1918
        %2177 = vmatmul.mubr.bf16.gmra.mrb[0].mxu0 %v1917
        %v2178 = vpop.f32.mrb[0].mxu0
        %v2179 = vadd.f32 0.0, %v2178
        %v2180 = vpop.f32.mrb[0].mxu0
        %v2181 = vpop.f32.mrb[0].mxu0
        %v2182 = vadd.f32 0.0, %v2181
        %v2183 = vpop.f32.mrb[0].mxu0
        %2184 = vmatprep.mubr.bf16.mxu0 %v1921
        %2185 = vmatmul.mubr.bf16.gmra.mrb[0].mxu0 %v1920
        %v2186 = vpop.f32.mrb[0].mxu0
        %v2187 = vadd.f32 0.0, %v2186
        %v2188 = vpop.f32.mrb[0].mxu0
        %v2189 = vpop.f32.mrb[0].mxu0
        %v2190 = vadd.f32 0.0, %v2189
        %v2191 = vpop.f32.mrb[0].mxu0
        %2192 = vmatprep.mubr.bf16.mxu0 %v1924
        %2193 = vmatmul.mubr.bf16.gmra.mrb[0].mxu0 %v1923
        %v2194 = vpop.f32.mrb[0].mxu0
        %v2195 = vadd.f32 0.0, %v2194
        %v2196 = vpop.f32.mrb[0].mxu0
        %v2197 = vpop.f32.mrb[0].mxu0
        %v2198 = vadd.f32 0.0, %v2197
        %v2199 = vpop.f32.mrb[0].mxu0
        %2200 = vmatprep.mubr.bf16.mxu0 %v1927
        %2201 = vmatmul.mubr.bf16.gmra.mrb[0].mxu0 %v1926
        %v2202 = vpop.f32.mrb[0].mxu0
        %v2203 = vadd.f32 0.0, %v2202
        %v2204 = vpop.f32.mrb[0].mxu0
        %v2205 = vpop.f32.mrb[0].mxu0
        %v2206 = vadd.f32 0.0, %v2205
        %v2207 = vpop.f32.mrb[0].mxu0
        %2208 = vmatprep.mubr.bf16.mxu0 %v1930
        %2209 = vmatmul.mubr.bf16.gmra.mrb[0].mxu0 %v1929
        %v2210 = vpop.f32.mrb[0].mxu0
        %v2211 = vadd.f32 0.0, %v2210
        %v2212 = vpop.f32.mrb[0].mxu0
        %v2213 = vpop.f32.mrb[0].mxu0
        %v2214 = vadd.f32 0.0, %v2213
        %v2215 = vpop.f32.mrb[0].mxu0
        %2216 = vmatprep.mubr.bf16.mxu0 %v1933
        %2217 = vmatmul.mubr.bf16.gmra.mrb[0].mxu0 %v1932
        %v2218 = vpop.f32.mrb[0].mxu0
        %v2219 = vadd.f32 0.0, %v2218
        %v2220 = vpop.f32.mrb[0].mxu0
        %v2221 = vpop.f32.mrb[0].mxu0
        %v2222 = vadd.f32 0.0, %v2221
        %v2223 = vpop.f32.mrb[0].mxu0
        %2224 = vdwg.mxu0
        %2225 = vmatprep.subr.bf16.mxu0 0
        %2226 = vmatpush1.bf16.msra.mxu0 %v2096
        %2227 = vmatprep.subr.bf16.mxu0 0
        %2228 = vmatpush1.bf16.msra.mxu0 %v2097
        %2229 = vmatprep.subr.bf16.mxu0 0
        %2230 = vmatpush1.bf16.msra.mxu0 %v2098
        %2231 = vmatprep.subr.bf16.mxu0 0
        %2232 = vmatpush1.bf16.msra.mxu0 %v2099
        %2233 = vmatprep.subr.bf16.mxu0 0
        %2234 = vmatpush1.bf16.msra.mxu0 %v2100
        %2235 = vmatprep.subr.bf16.mxu0 0
        %2236 = vmatpush1.bf16.msra.mxu0 %v2101
        %2237 = vmatprep.subr.bf16.mxu0 0
        %2238 = vmatpush1.bf16.msra.mxu0 %v2102
        %2239 = vmatprep.subr.bf16.mxu0 0
        %2240 = vmatpush1.bf16.msra.mxu0 %v2103
        %2241 = vmatprep.subr.bf16.mxu0 0
        %2242 = vmatpush1.bf16.msra.mxu0 0
        %2243 = vmatprep.subr.bf16.mxu0 0
        %2244 = vmatpush1.bf16.msra.mxu0 0
        %2245 = vmatprep.subr.bf16.mxu0 0
        %2246 = vmatpush1.bf16.msra.mxu0 0
        %2247 = vmatprep.subr.bf16.mxu0 0
        %2248 = vmatpush1.bf16.msra.mxu0 0
        %2249 = vmatprep.subr.bf16.mxu0 0
        %2250 = vmatpush1.bf16.msra.mxu0 0
        %2251 = vmatprep.subr.bf16.mxu0 0
        %2252 = vmatpush1.bf16.msra.mxu0 0
        %2253 = vmatprep.subr.bf16.mxu0 0
        %2254 = vmatpush1.bf16.msra.mxu0 0
        %2255 = vmatprep.subr.bf16.mxu0 0
        %2256 = vmatpush1.bf16.msra.mxu0 0
        %2257 = vmatprep.mubr.bf16.mxu0 0
        %2258 = vmatmul.mubr.bf16.gmra.mrb[0].mxu0 %v1913
        %v2259 = vpop.f32.mrb[0].mxu0
        %v2260 = vadd.f32 %v2163, %v2259
        %v2261 = vpop.f32.mrb[0].mxu0
        %v2262 = vpop.f32.mrb[0].mxu0
        %v2263 = vadd.f32 %v2166, %v2262
        %v2264 = vpop.f32.mrb[0].mxu0
        %2265 = vmatprep.mubr.bf16.mxu0 0
        %2266 = vmatmul.mubr.bf16.gmra.mrb[0].mxu0 %v1916
        %v2267 = vpop.f32.mrb[0].mxu0
        %v2268 = vadd.f32 %v2171, %v2267
        %v2269 = vpop.f32.mrb[0].mxu0
        %v2270 = vpop.f32.mrb[0].mxu0
        %v2271 = vadd.f32 %v2174, %v2270
        %v2272 = vpop.f32.mrb[0].mxu0
        %2273 = vmatprep.mubr.bf16.mxu0 0
        %2274 = vmatmul.mubr.bf16.gmra.mrb[0].mxu0 %v1919
        %v2275 = vpop.f32.mrb[0].mxu0
        %v2276 = vadd.f32 %v2179, %v2275
        %v2277 = vpop.f32.mrb[0].mxu0
        %v2278 = vpop.f32.mrb[0].mxu0
        %v2279 = vadd.f32 %v2182, %v2278
        %v2280 = vpop.f32.mrb[0].mxu0
        %2281 = vmatprep.mubr.bf16.mxu0 0
        %2282 = vmatmul.mubr.bf16.gmra.mrb[0].mxu0 %v1922
        %v2283 = vpop.f32.mrb[0].mxu0
        %v2284 = vadd.f32 %v2187, %v2283
        %v2285 = vpop.f32.mrb[0].mxu0
        %v2286 = vpop.f32.mrb[0].mxu0
        %v2287 = vadd.f32 %v2190, %v2286
        %v2288 = vpop.f32.mrb[0].mxu0
        %2289 = vmatprep.mubr.bf16.mxu0 0
        %2290 = vmatmul.mubr.bf16.gmra.mrb[0].mxu0 %v1925
        %v2291 = vpop.f32.mrb[0].mxu0
        %v2292 = vadd.f32 %v2195, %v2291
        %v2293 = vpop.f32.mrb[0].mxu0
        %v2294 = vpop.f32.mrb[0].mxu0
        %v2295 = vadd.f32 %v2198, %v2294
        %v2296 = vpop.f32.mrb[0].mxu0
        %2297 = vmatprep.mubr.bf16.mxu0 0
        %2298 = vmatmul.mubr.bf16.gmra.mrb[0].mxu0 %v1928
        %v2299 = vpop.f32.mrb[0].mxu0
        %v2300 = vadd.f32 %v2203, %v2299
        %v2301 = vpop.f32.mrb[0].mxu0
        %v2302 = vpop.f32.mrb[0].mxu0
        %v2303 = vadd.f32 %v2206, %v2302
        %v2304 = vpop.f32.mrb[0].mxu0
        %2305 = vmatprep.mubr.bf16.mxu0 0
        %2306 = vmatmul.mubr.bf16.gmra.mrb[0].mxu0 %v1931
        %v2307 = vpop.f32.mrb[0].mxu0
        %v2308 = vadd.f32 %v2211, %v2307
        %v2309 = vpop.f32.mrb[0].mxu0
        %v2310 = vpop.f32.mrb[0].mxu0
        %v2311 = vadd.f32 %v2214, %v2310
        %v2312 = vpop.f32.mrb[0].mxu0
        %2313 = vmatprep.mubr.bf16.mxu0 0
        %2314 = vmatmul.mubr.bf16.gmra.mrb[0].mxu0 %v1934
        %v2315 = vpop.f32.mrb[0].mxu0
        %v2316 = vadd.f32 %v2219, %v2315
        %v2317 = vpop.f32.mrb[0].mxu0
        %v2318 = vpop.f32.mrb[0].mxu0
        %v2319 = vadd.f32 %v2222, %v2318
        %v2320 = vpop.f32.mrb[0].mxu0
        %2321 = vdwg.mxu0
        %v2322 = vadd.f32 %v1894, %v2260
        %v2323 = vadd.f32 %v1895, %v2263
        %v2324 = vadd.f32 %v1896, %v2268
        %v2325 = vadd.f32 %v1897, %v2271
        %v2326 = vadd.f32 %v1898, %v2276
        %v2327 = vadd.f32 %v1899, %v2279
        %v2328 = vadd.f32 %v1900, %v2284
        %v2329 = vadd.f32 %v1901, %v2287
        %v2330 = vadd.f32 %v1902, %v2292
        %v2331 = vadd.f32 %v1903, %v2295
        %v2332 = vadd.f32 %v1904, %v2300
        %v2333 = vadd.f32 %v1905, %v2303
        %v2334 = vadd.f32 %v1906, %v2308
        %v2335 = vadd.f32 %v1907, %v2311
        %v2336 = vadd.f32 %v1908, %v2316
        %v2337 = vadd.f32 %v1909, %v2319
        %s2338 = scalar_lea.vmem [#allocation3], 48
        %v2339 = vld [vmem:[%s2338] sm:$0xff]
        %v2340 = vld [vmem:[%s2338 + $0x8] sm:$0xff]
        %v2341 = vld [vmem:[%s2338 + $0x10] sm:$0xff]
        %v2342 = vld [vmem:[%s2338 + $0x18] sm:$0xff]
        %v2343 = vld [vmem:[%s2338 + $0x20] sm:$0xff]
        %v2344 = vld [vmem:[%s2338 + $0x28] sm:$0xff]
        %v2345 = vld [vmem:[%s2338 + $0x30] sm:$0xff]
        %v2346 = vld [vmem:[%s2338 + $0x38] sm:$0xff]
        %v2347 = vld [vmem:[%s2338 + $0x40] sm:$0xff]
        %v2348 = vld [vmem:[%s2338 + $0x48] sm:$0xff]
        %v2349 = vld [vmem:[%s2338 + $0x50] sm:$0xff]
        %v2350 = vld [vmem:[%s2338 + $0x58] sm:$0xff]
        %v2351 = vld [vmem:[%s2338 + $0x60] sm:$0xff]
        %v2352 = vld [vmem:[%s2338 + $0x68] sm:$0xff]
        %v2353 = vld [vmem:[%s2338 + $0x70] sm:$0xff]
        %v2354 = vld [vmem:[%s2338 + $0x78] sm:$0xff]
        %v2355 = vld [vmem:[%s2338 + $0x80] sm:$0xff]
        %v2356 = vld [vmem:[%s2338 + $0x88] sm:$0xff]
        %v2357 = vld [vmem:[%s2338 + $0x90] sm:$0xff]
        %v2358 = vld [vmem:[%s2338 + $0x98] sm:$0xff]
        %v2359 = vld [vmem:[%s2338 + $0xa0] sm:$0xff]
        %v2360 = vld [vmem:[%s2338 + $0xa8] sm:$0xff]
        %v2361 = vld [vmem:[%s2338 + $0xb0] sm:$0xff]
        %v2362 = vld [vmem:[%s2338 + $0xb8] sm:$0xff]
        %s2363 = scalar_lea.vmem [#allocation9], 384
        %v2364 = vld [vmem:[%s2363] sm:$0xf]
        %v2365 = vld [vmem:[%s2363 + $0x4] sm:$0xf]
        %v2366 = vld [vmem:[%s2363 + $0x8] sm:$0xf]
        %v2367 = vld [vmem:[%s2363 + $0xc] sm:$0xf]
        %v2368 = vld [vmem:[%s2363 + $0x10] sm:$0xf]
        %v2369 = vld [vmem:[%s2363 + $0x14] sm:$0xf]
        %v2370 = vld [vmem:[%s2363 + $0x18] sm:$0xf]
        %v2371 = vld [vmem:[%s2363 + $0x1c] sm:$0xf]
        %v2372 = vld [vmem:[%s2363 + $0x20] sm:$0xf]
        %v2373 = vld [vmem:[%s2363 + $0x24] sm:$0xf]
        %v2374 = vld [vmem:[%s2363 + $0x28] sm:$0xf]
        %v2375 = vld [vmem:[%s2363 + $0x2c] sm:$0xf]
        %v2376 = vld [vmem:[%s2363 + $0x30] sm:$0xf]
        %v2377 = vld [vmem:[%s2363 + $0x34] sm:$0xf]
        %v2378 = vld [vmem:[%s2363 + $0x38] sm:$0xf]
        %v2379 = vld [vmem:[%s2363 + $0x3c] sm:$0xf]
        %v2380 = vld [vmem:[%s2363 + $0x40] sm:$0xf]
        %v2381 = vld [vmem:[%s2363 + $0x44] sm:$0xf]
        %v2382 = vld [vmem:[%s2363 + $0x48] sm:$0xf]
        %v2383 = vld [vmem:[%s2363 + $0x4c] sm:$0xf]
        %v2384 = vld [vmem:[%s2363 + $0x50] sm:$0xf]
        %v2385 = vld [vmem:[%s2363 + $0x54] sm:$0xf]
        %v2386 = vld [vmem:[%s2363 + $0x58] sm:$0xf]
        %v2387 = vld [vmem:[%s2363 + $0x5c] sm:$0xf]
        %v2388 = vld [vmem:[%s2363 + $0x60] sm:$0xf]
        %v2389 = vld [vmem:[%s2363 + $0x64] sm:$0xf]
        %v2390 = vld [vmem:[%s2363 + $0x68] sm:$0xf]
        %v2391 = vld [vmem:[%s2363 + $0x6c] sm:$0xf]
        %v2392 = vld [vmem:[%s2363 + $0x70] sm:$0xf]
        %v2393 = vld [vmem:[%s2363 + $0x74] sm:$0xf]
        %v2394 = vld [vmem:[%s2363 + $0x78] sm:$0xf]
        %v2395 = vld [vmem:[%s2363 + $0x7c] sm:$0xf]
        %v2396 = vld [vmem:[%s2363 + $0x80] sm:$0xf]
        %v2397 = vld [vmem:[%s2363 + $0x84] sm:$0xf]
        %v2398 = vld [vmem:[%s2363 + $0x88] sm:$0xf]
        %v2399 = vld [vmem:[%s2363 + $0x8c] sm:$0xf]
        %v2400 = vld [vmem:[%s2363 + $0x90] sm:$0xf]
        %v2401 = vld [vmem:[%s2363 + $0x94] sm:$0xf]
        %v2402 = vld [vmem:[%s2363 + $0x98] sm:$0xf]
        %v2403 = vld [vmem:[%s2363 + $0x9c] sm:$0xf]
        %v2404 = vld [vmem:[%s2363 + $0xa0] sm:$0xf]
        %v2405 = vld [vmem:[%s2363 + $0xa4] sm:$0xf]
        %v2406 = vld [vmem:[%s2363 + $0xa8] sm:$0xf]
        %v2407 = vld [vmem:[%s2363 + $0xac] sm:$0xf]
        %v2408 = vld [vmem:[%s2363 + $0xb0] sm:$0xf]
        %v2409 = vld [vmem:[%s2363 + $0xb4] sm:$0xf]
        %v2410 = vld [vmem:[%s2363 + $0xb8] sm:$0xf]
        %v2411 = vld [vmem:[%s2363 + $0xbc] sm:$0xf]
        %v2460 = vunpack.c.l.b16 %v2364
        %v2461 = vunpack.c.l.b16 %v2365
        %v2462 = vunpack.c.l.b16 %v2366
        %v2463 = vunpack.c.l.b16 %v2367
        %v2464 = vunpack.c.l.b16 %v2368
        %v2465 = vunpack.c.l.b16 %v2369
        %v2466 = vunpack.c.l.b16 %v2370
        %v2467 = vunpack.c.l.b16 %v2371
        %v2468 = vunpack.c.l.b16 %v2372
        %v2469 = vunpack.c.l.b16 %v2373
        %v2470 = vunpack.c.l.b16 %v2374
        %v2471 = vunpack.c.l.b16 %v2375
        %v2472 = vunpack.c.l.b16 %v2376
        %v2473 = vunpack.c.l.b16 %v2377
        %v2474 = vunpack.c.l.b16 %v2378
        %v2475 = vunpack.c.l.b16 %v2379
        %v2476 = vunpack.c.l.b16 %v2380
        %v2477 = vunpack.c.l.b16 %v2381
        %v2478 = vunpack.c.l.b16 %v2382
        %v2479 = vunpack.c.l.b16 %v2383
        %v2480 = vunpack.c.l.b16 %v2384
        %v2481 = vunpack.c.l.b16 %v2385
        %v2482 = vunpack.c.l.b16 %v2386
        %v2483 = vunpack.c.l.b16 %v2387
        %v2484 = vunpack.c.l.b16 %v2388
        %v2485 = vunpack.c.l.b16 %v2389
        %v2486 = vunpack.c.l.b16 %v2390
        %v2487 = vunpack.c.l.b16 %v2391
        %v2488 = vunpack.c.l.b16 %v2392
        %v2489 = vunpack.c.l.b16 %v2393
        %v2490 = vunpack.c.l.b16 %v2394
        %v2491 = vunpack.c.l.b16 %v2395
        %v2492 = vunpack.c.l.b16 %v2396
        %v2493 = vunpack.c.l.b16 %v2397
        %v2494 = vunpack.c.l.b16 %v2398
        %v2495 = vunpack.c.l.b16 %v2399
        %v2496 = vunpack.c.l.b16 %v2400
        %v2497 = vunpack.c.l.b16 %v2401
        %v2498 = vunpack.c.l.b16 %v2402
        %v2499 = vunpack.c.l.b16 %v2403
        %v2500 = vunpack.c.l.b16 %v2404
        %v2501 = vunpack.c.l.b16 %v2405
        %v2502 = vunpack.c.l.b16 %v2406
        %v2503 = vunpack.c.l.b16 %v2407
        %v2504 = vunpack.c.l.b16 %v2408
        %v2505 = vunpack.c.l.b16 %v2409
        %v2506 = vunpack.c.l.b16 %v2410
        %v2507 = vunpack.c.l.b16 %v2411
        %v2508 = vpack.c.b16 %v2461, %v2460
        %v2509 = vpack.c.b16 %v2463, %v2462
        %v2510 = vpack.c.b16 %v2465, %v2464
        %v2511 = vpack.c.b16 %v2467, %v2466
        %v2512 = vpack.c.b16 %v2469, %v2468
        %v2513 = vpack.c.b16 %v2471, %v2470
        %v2514 = vpack.c.b16 %v2473, %v2472
        %v2515 = vpack.c.b16 %v2475, %v2474
        %v2516 = vpack.c.b16 %v2477, %v2476
        %v2517 = vpack.c.b16 %v2479, %v2478
        %v2518 = vpack.c.b16 %v2481, %v2480
        %v2519 = vpack.c.b16 %v2483, %v2482
        %v2520 = vpack.c.b16 %v2485, %v2484
        %v2521 = vpack.c.b16 %v2487, %v2486
        %v2522 = vpack.c.b16 %v2489, %v2488
        %v2523 = vpack.c.b16 %v2491, %v2490
        %v2524 = vpack.c.b16 %v2493, %v2492
        %v2525 = vpack.c.b16 %v2495, %v2494
        %v2526 = vpack.c.b16 %v2497, %v2496
        %v2527 = vpack.c.b16 %v2499, %v2498
        %v2528 = vpack.c.b16 %v2501, %v2500
        %v2529 = vpack.c.b16 %v2503, %v2502
        %v2530 = vpack.c.b16 %v2505, %v2504
        %v2531 = vpack.c.b16 %v2507, %v2506
        %2556 = vmatprep.subr.bf16.mxu0 0
        %2557 = vmatpush1.bf16.msra.mxu0 %v2508
        %2558 = vmatprep.subr.bf16.mxu0 0
        %2559 = vmatpush1.bf16.msra.mxu0 %v2509
        %2560 = vmatprep.subr.bf16.mxu0 0
        %2561 = vmatpush1.bf16.msra.mxu0 %v2510
        %2562 = vmatprep.subr.bf16.mxu0 0
        %2563 = vmatpush1.bf16.msra.mxu0 %v2511
        %2564 = vmatprep.subr.bf16.mxu0 0
        %2565 = vmatpush1.bf16.msra.mxu0 %v2512
        %2566 = vmatprep.subr.bf16.mxu0 0
        %2567 = vmatpush1.bf16.msra.mxu0 %v2513
        %2568 = vmatprep.subr.bf16.mxu0 0
        %2569 = vmatpush1.bf16.msra.mxu0 %v2514
        %2570 = vmatprep.subr.bf16.mxu0 0
        %2571 = vmatpush1.bf16.msra.mxu0 %v2515
        %2572 = vmatprep.subr.bf16.mxu0 0
        %2573 = vmatpush1.bf16.msra.mxu0 %v2516
        %2574 = vmatprep.subr.bf16.mxu0 0
        %2575 = vmatpush1.bf16.msra.mxu0 %v2517
        %2576 = vmatprep.subr.bf16.mxu0 0
        %2577 = vmatpush1.bf16.msra.mxu0 %v2518
        %2578 = vmatprep.subr.bf16.mxu0 0
        %2579 = vmatpush1.bf16.msra.mxu0 %v2519
        %2580 = vmatprep.subr.bf16.mxu0 0
        %2581 = vmatpush1.bf16.msra.mxu0 %v2520
        %2582 = vmatprep.subr.bf16.mxu0 0
        %2583 = vmatpush1.bf16.msra.mxu0 %v2521
        %2584 = vmatprep.subr.bf16.mxu0 0
        %2585 = vmatpush1.bf16.msra.mxu0 %v2522
        %2586 = vmatprep.subr.bf16.mxu0 0
        %2587 = vmatpush1.bf16.msra.mxu0 %v2523
        %2588 = vmatprep.mubr.bf16.mxu0 %v2340
        %2589 = vmatmul.mubr.bf16.gmra.mrb[0].mxu0 %v2339
        %v2590 = vpop.f32.mrb[0].mxu0
        %v2591 = vadd.f32 0.0, %v2590
        %v2592 = vpop.f32.mrb[0].mxu0
        %v2593 = vpop.f32.mrb[0].mxu0
        %v2594 = vadd.f32 0.0, %v2593
        %v2595 = vpop.f32.mrb[0].mxu0
        %2596 = vmatprep.mubr.bf16.mxu0 %v2343
        %2597 = vmatmul.mubr.bf16.gmra.mrb[0].mxu0 %v2342
        %v2598 = vpop.f32.mrb[0].mxu0
        %v2599 = vadd.f32 0.0, %v2598
        %v2600 = vpop.f32.mrb[0].mxu0
        %v2601 = vpop.f32.mrb[0].mxu0
        %v2602 = vadd.f32 0.0, %v2601
        %v2603 = vpop.f32.mrb[0].mxu0
        %2604 = vmatprep.mubr.bf16.mxu0 %v2346
        %2605 = vmatmul.mubr.bf16.gmra.mrb[0].mxu0 %v2345
        %v2606 = vpop.f32.mrb[0].mxu0
        %v2607 = vadd.f32 0.0, %v2606
        %v2608 = vpop.f32.mrb[0].mxu0
        %v2609 = vpop.f32.mrb[0].mxu0
        %v2610 = vadd.f32 0.0, %v2609
        %v2611 = vpop.f32.mrb[0].mxu0
        %2612 = vmatprep.mubr.bf16.mxu0 %v2349
        %2613 = vmatmul.mubr.bf16.gmra.mrb[0].mxu0 %v2348
        %v2614 = vpop.f32.mrb[0].mxu0
        %v2615 = vadd.f32 0.0, %v2614
        %v2616 = vpop.f32.mrb[0].mxu0
        %v2617 = vpop.f32.mrb[0].mxu0
        %v2618 = vadd.f32 0.0, %v2617
        %v2619 = vpop.f32.mrb[0].mxu0
        %2620 = vmatprep.mubr.bf16.mxu0 %v2352
        %2621 = vmatmul.mubr.bf16.gmra.mrb[0].mxu0 %v2351
        %v2622 = vpop.f32.mrb[0].mxu0
        %v2623 = vadd.f32 0.0, %v2622
        %v2624 = vpop.f32.mrb[0].mxu0
        %v2625 = vpop.f32.mrb[0].mxu0
        %v2626 = vadd.f32 0.0, %v2625
        %v2627 = vpop.f32.mrb[0].mxu0
        %2628 = vmatprep.mubr.bf16.mxu0 %v2355
        %2629 = vmatmul.mubr.bf16.gmra.mrb[0].mxu0 %v2354
        %v2630 = vpop.f32.mrb[0].mxu0
        %v2631 = vadd.f32 0.0, %v2630
        %v2632 = vpop.f32.mrb[0].mxu0
        %v2633 = vpop.f32.mrb[0].mxu0
        %v2634 = vadd.f32 0.0, %v2633
        %v2635 = vpop.f32.mrb[0].mxu0
        %2636 = vmatprep.mubr.bf16.mxu0 %v2358
        %2637 = vmatmul.mubr.bf16.gmra.mrb[0].mxu0 %v2357
        %v2638 = vpop.f32.mrb[0].mxu0
        %v2639 = vadd.f32 0.0, %v2638
        %v2640 = vpop.f32.mrb[0].mxu0
        %v2641 = vpop.f32.mrb[0].mxu0
        %v2642 = vadd.f32 0.0, %v2641
        %v2643 = vpop.f32.mrb[0].mxu0
        %2644 = vmatprep.mubr.bf16.mxu0 %v2361
        %2645 = vmatmul.mubr.bf16.gmra.mrb[0].mxu0 %v2360
        %v2646 = vpop.f32.mrb[0].mxu0
        %v2647 = vadd.f32 0.0, %v2646
        %v2648 = vpop.f32.mrb[0].mxu0
        %v2649 = vpop.f32.mrb[0].mxu0
        %v2650 = vadd.f32 0.0, %v2649
        %v2651 = vpop.f32.mrb[0].mxu0
        %2652 = vdwg.mxu0
        %2653 = vmatprep.subr.bf16.mxu0 0
        %2654 = vmatpush1.bf16.msra.mxu0 %v2524
        %2655 = vmatprep.subr.bf16.mxu0 0
        %2656 = vmatpush1.bf16.msra.mxu0 %v2525
        %2657 = vmatprep.subr.bf16.mxu0 0
        %2658 = vmatpush1.bf16.msra.mxu0 %v2526
        %2659 = vmatprep.subr.bf16.mxu0 0
        %2660 = vmatpush1.bf16.msra.mxu0 %v2527
        %2661 = vmatprep.subr.bf16.mxu0 0
        %2662 = vmatpush1.bf16.msra.mxu0 %v2528
        %2663 = vmatprep.subr.bf16.mxu0 0
        %2664 = vmatpush1.bf16.msra.mxu0 %v2529
        %2665 = vmatprep.subr.bf16.mxu0 0
        %2666 = vmatpush1.bf16.msra.mxu0 %v2530
        %2667 = vmatprep.subr.bf16.mxu0 0
        %2668 = vmatpush1.bf16.msra.mxu0 %v2531
        %2669 = vmatprep.subr.bf16.mxu0 0
        %2670 = vmatpush1.bf16.msra.mxu0 0
        %2671 = vmatprep.subr.bf16.mxu0 0
        %2672 = vmatpush1.bf16.msra.mxu0 0
        %2673 = vmatprep.subr.bf16.mxu0 0
        %2674 = vmatpush1.bf16.msra.mxu0 0
        %2675 = vmatprep.subr.bf16.mxu0 0
        %2676 = vmatpush1.bf16.msra.mxu0 0
        %2677 = vmatprep.subr.bf16.mxu0 0
        %2678 = vmatpush1.bf16.msra.mxu0 0
        %2679 = vmatprep.subr.bf16.mxu0 0
        %2680 = vmatpush1.bf16.msra.mxu0 0
        %2681 = vmatprep.subr.bf16.mxu0 0
        %2682 = vmatpush1.bf16.msra.mxu0 0
        %2683 = vmatprep.subr.bf16.mxu0 0
        %2684 = vmatpush1.bf16.msra.mxu0 0
        %2685 = vmatprep.mubr.bf16.mxu0 0
        %2686 = vmatmul.mubr.bf16.gmra.mrb[0].mxu0 %v2341
        %v2687 = vpop.f32.mrb[0].mxu0
        %v2688 = vadd.f32 %v2591, %v2687
        %v2689 = vpop.f32.mrb[0].mxu0
        %v2690 = vpop.f32.mrb[0].mxu0
        %v2691 = vadd.f32 %v2594, %v2690
        %v2692 = vpop.f32.mrb[0].mxu0
        %2693 = vmatprep.mubr.bf16.mxu0 0
        %2694 = vmatmul.mubr.bf16.gmra.mrb[0].mxu0 %v2344
        %v2695 = vpop.f32.mrb[0].mxu0
        %v2696 = vadd.f32 %v2599, %v2695
        %v2697 = vpop.f32.mrb[0].mxu0
        %v2698 = vpop.f32.mrb[0].mxu0
        %v2699 = vadd.f32 %v2602, %v2698
        %v2700 = vpop.f32.mrb[0].mxu0
        %2701 = vmatprep.mubr.bf16.mxu0 0
        %2702 = vmatmul.mubr.bf16.gmra.mrb[0].mxu0 %v2347
        %v2703 = vpop.f32.mrb[0].mxu0
        %v2704 = vadd.f32 %v2607, %v2703
        %v2705 = vpop.f32.mrb[0].mxu0
        %v2706 = vpop.f32.mrb[0].mxu0
        %v2707 = vadd.f32 %v2610, %v2706
        %v2708 = vpop.f32.mrb[0].mxu0
        %2709 = vmatprep.mubr.bf16.mxu0 0
        %2710 = vmatmul.mubr.bf16.gmra.mrb[0].mxu0 %v2350
        %v2711 = vpop.f32.mrb[0].mxu0
        %v2712 = vadd.f32 %v2615, %v2711
        %v2713 = vpop.f32.mrb[0].mxu0
        %v2714 = vpop.f32.mrb[0].mxu0
        %v2715 = vadd.f32 %v2618, %v2714
        %v2716 = vpop.f32.mrb[0].mxu0
        %2717 = vmatprep.mubr.bf16.mxu0 0
        %2718 = vmatmul.mubr.bf16.gmra.mrb[0].mxu0 %v2353
        %v2719 = vpop.f32.mrb[0].mxu0
        %v2720 = vadd.f32 %v2623, %v2719
        %v2721 = vpop.f32.mrb[0].mxu0
        %v2722 = vpop.f32.mrb[0].mxu0
        %v2723 = vadd.f32 %v2626, %v2722
        %v2724 = vpop.f32.mrb[0].mxu0
        %2725 = vmatprep.mubr.bf16.mxu0 0
        %2726 = vmatmul.mubr.bf16.gmra.mrb[0].mxu0 %v2356
        %v2727 = vpop.f32.mrb[0].mxu0
        %v2728 = vadd.f32 %v2631, %v2727
        %v2729 = vpop.f32.mrb[0].mxu0
        %v2730 = vpop.f32.mrb[0].mxu0
        %v2731 = vadd.f32 %v2634, %v2730
        %v2732 = vpop.f32.mrb[0].mxu0
        %2733 = vmatprep.mubr.bf16.mxu0 0
        %2734 = vmatmul.mubr.bf16.gmra.mrb[0].mxu0 %v2359
        %v2735 = vpop.f32.mrb[0].mxu0
        %v2736 = vadd.f32 %v2639, %v2735
        %v2737 = vpop.f32.mrb[0].mxu0
        %v2738 = vpop.f32.mrb[0].mxu0
        %v2739 = vadd.f32 %v2642, %v2738
        %v2740 = vpop.f32.mrb[0].mxu0
        %2741 = vmatprep.mubr.bf16.mxu0 0
        %2742 = vmatmul.mubr.bf16.gmra.mrb[0].mxu0 %v2362
        %v2743 = vpop.f32.mrb[0].mxu0
        %v2744 = vadd.f32 %v2647, %v2743
        %v2745 = vpop.f32.mrb[0].mxu0
        %v2746 = vpop.f32.mrb[0].mxu0
        %v2747 = vadd.f32 %v2650, %v2746
        %v2748 = vpop.f32.mrb[0].mxu0
        %2749 = vdwg.mxu0
        %v2750 = vadd.f32 %v2322, %v2688
        %v2751 = vadd.f32 %v2323, %v2691
        %v2752 = vadd.f32 %v2324, %v2696
        %v2753 = vadd.f32 %v2325, %v2699
        %v2754 = vadd.f32 %v2326, %v2704
        %v2755 = vadd.f32 %v2327, %v2707
        %v2756 = vadd.f32 %v2328, %v2712
        %v2757 = vadd.f32 %v2329, %v2715
        %v2758 = vadd.f32 %v2330, %v2720
        %v2759 = vadd.f32 %v2331, %v2723
        %v2760 = vadd.f32 %v2332, %v2728
        %v2761 = vadd.f32 %v2333, %v2731
        %v2762 = vadd.f32 %v2334, %v2736
        %v2763 = vadd.f32 %v2335, %v2739
        %v2764 = vadd.f32 %v2336, %v2744
        %v2765 = vadd.f32 %v2337, %v2747
        %v2766 = vmax.f32 %v2750, 0.0
        %v2767 = vmax.f32 %v2751, 0.0
        %v2768 = vmax.f32 %v2752, 0.0
        %v2769 = vmax.f32 %v2753, 0.0
        %v2770 = vmax.f32 %v2754, 0.0
        %v2771 = vmax.f32 %v2755, 0.0
        %v2772 = vmax.f32 %v2756, 0.0
        %v2773 = vmax.f32 %v2757, 0.0
        %v2774 = vmax.f32 %v2758, 0.0
        %v2775 = vmax.f32 %v2759, 0.0
        %v2776 = vmax.f32 %v2760, 0.0
        %v2777 = vmax.f32 %v2761, 0.0
        %v2778 = vmax.f32 %v2762, 0.0
        %v2779 = vmax.f32 %v2763, 0.0
        %v2780 = vmax.f32 %v2764, 0.0
        %v2781 = vmax.f32 %v2765, 0.0
        %v2782 = vpack.c.bf16 %v2767, %v2766
        %v2783 = vpack.c.bf16 %v2769, %v2768
        %v2784 = vpack.c.bf16 %v2771, %v2770
        %v2785 = vpack.c.bf16 %v2773, %v2772
        %v2786 = vpack.c.bf16 %v2775, %v2774
        %v2787 = vpack.c.bf16 %v2777, %v2776
        %v2788 = vpack.c.bf16 %v2779, %v2778
        %v2789 = vpack.c.bf16 %v2781, %v2780
        %v2798 = vunpack.c.l.b16 %v2782
        %v2799 = vunpack.c.h.b16 %v2782
        %v2800 = vunpack.c.l.b16 %v2783
        %v2801 = vunpack.c.h.b16 %v2783
        %v2802 = vunpack.c.l.b16 %v2784
        %v2803 = vunpack.c.h.b16 %v2784
        %v2804 = vunpack.c.l.b16 %v2785
        %v2805 = vunpack.c.h.b16 %v2785
        %v2806 = vunpack.c.l.b16 %v2786
        %v2807 = vunpack.c.h.b16 %v2786
        %v2808 = vunpack.c.l.b16 %v2787
        %v2809 = vunpack.c.h.b16 %v2787
        %v2810 = vunpack.c.l.b16 %v2788
        %v2811 = vunpack.c.h.b16 %v2788
        %v2812 = vunpack.c.l.b16 %v2789
        %v2813 = vunpack.c.h.b16 %v2789
        %v2814 = vpack.c.b16 %v2798, %v2798
        %v2815 = vpack.c.b16 %v2799, %v2799
        %v2816 = vpack.c.b16 %v2800, %v2800
        %v2817 = vpack.c.b16 %v2801, %v2801
        %v2818 = vpack.c.b16 %v2802, %v2802
        %v2819 = vpack.c.b16 %v2803, %v2803
        %v2820 = vpack.c.b16 %v2804, %v2804
        %v2821 = vpack.c.b16 %v2805, %v2805
        %v2822 = vpack.c.b16 %v2806, %v2806
        %v2823 = vpack.c.b16 %v2807, %v2807
        %v2824 = vpack.c.b16 %v2808, %v2808
        %v2825 = vpack.c.b16 %v2809, %v2809
        %v2826 = vpack.c.b16 %v2810, %v2810
        %v2827 = vpack.c.b16 %v2811, %v2811
        %v2828 = vpack.c.b16 %v2812, %v2812
        %v2829 = vpack.c.b16 %v2813, %v2813
        %2846 = vst [vmem:[%s264] sm:$0xf] %v2814
        %2847 = vst [vmem:[%s264 + $0x4] sm:$0xf] %v2815
        %2848 = vst [vmem:[%s264 + $0x8] sm:$0xf] %v2816
        %2849 = vst [vmem:[%s264 + $0xc] sm:$0xf] %v2817
        %2850 = vst [vmem:[%s264 + $0x10] sm:$0xf] %v2818
        %2851 = vst [vmem:[%s264 + $0x14] sm:$0xf] %v2819
        %2852 = vst [vmem:[%s264 + $0x18] sm:$0xf] %v2820
        %2853 = vst [vmem:[%s264 + $0x1c] sm:$0xf] %v2821
        %2854 = vst [vmem:[%s264 + $0x20] sm:$0xf] %v2822
        %2855 = vst [vmem:[%s264 + $0x24] sm:$0xf] %v2823
        %2856 = vst [vmem:[%s264 + $0x28] sm:$0xf] %v2824
        %2857 = vst [vmem:[%s264 + $0x2c] sm:$0xf] %v2825
        %2858 = vst [vmem:[%s264 + $0x30] sm:$0xf] %v2826
        %2859 = vst [vmem:[%s264 + $0x34] sm:$0xf] %v2827
        %2860 = vst [vmem:[%s264 + $0x38] sm:$0xf] %v2828
        %2861 = vst [vmem:[%s264 + $0x3c] sm:$0xf] %v2829
        %s2862 = sand.u32 %s137, 1
        %s2863 = scalar_lea.sflag [#allocation6], %s2862
        %s2864 = sand.u32 %s137, 1
        %s2865 = smul.addr %s2864, 64
        %s2866 = scalar_lea.vmem [#allocation10], %s2865
        // Predicated region
        $region57: #{tpu_custom_call.1} parent=35 // pred_check
          %p2867 = pneg %p147
        $region58: #{tpu_custom_call.1} parent=35 // pred_check_branch
          %2869 = sbr.rel (%p2867) target = $region60
        $region59: #{tpu_custom_call.1} parent=35 // pred_region
          %s2870 = smul.u32 8, %s27
          %s2872 = ssub.s32 1024, 1024
          %2873 = vsyncadd %s2863, %s2872
          %s2874 = smul.addr %s2870, 2
          %s2875 = smul.addr %s26, 32
          %s2876 = sadd.s32 %s2874, %s2875
          %s2877 = smul.addr %s2876, 64
          %s2878 = scalar_lea.hbm %s4, %s2877
          %s2879 = sshll.u32 %s2866, 4
          %s2880 = int_to_ptr.vmem [resolvable:$true] %s2879
          %2885 = dma.vmem_to_hbm [thread:$0]  %s2880, 1024, %s2878, %s2863, 64, 64, 4
        $region60: #{tpu_custom_call.1} parent=35 // pred_fallthru
          _
      $region36: #{tpu_custom_call.1} parent=5 // pred_fallthru
        _
      %p2886 = scmp.le.s32.totalorder 2, %s17
      // Predicated region
      $region61: #{tpu_custom_call.1} parent=5 // pred_check
        %p2887 = pneg %p2886
      $region62: #{tpu_custom_call.1} parent=5 // pred_check_branch
        %2889 = sbr.rel (%p2887) target = $region64
      $region63: #{tpu_custom_call.1} parent=5 // pred_region
        %s2890 = ssub.s32 %s17, 2
        // Predicated region
        $region65: #{tpu_custom_call.1} parent=63 // pred_check
          %p2891 = pneg %p153
        $region66: #{tpu_custom_call.1} parent=63 // pred_check_branch
          %2893 = sbr.rel (%p2891) target = $region68
        $region67: #{tpu_custom_call.1} parent=63 // pred_region
          %s2894 = sand.u32 %s138, 1
          %s2895 = scalar_lea.sflag [#allocation6], %s2894
          %s2896 = sand.u32 %s138, 1
          %s2897 = smul.addr %s2896, 64
          %s2898 = scalar_lea.vmem [#allocation10], %s2897
          %2899 = dma.done %s2895, 1024
        $region68: #{tpu_custom_call.1} parent=63 // pred_fallthru
          _
      $region64: #{tpu_custom_call.1} parent=5 // pred_fallthru
        _
    $region6: #{tpu_custom_call.1} parent=1 // loop_footer
      %s21 = sadd.s32 1, %s17
    $region7: #{tpu_custom_call.1} parent=1 // loop_footer_branch
      %16 = sbr.rel target = $region3
    $region8: #{tpu_custom_call.1} parent=1 // loop_exit
      _
    %2900 = vsyncpa [#allocation5], 1
    %s2901 = scalar_lea.sflag [#allocation5], 1
    %2902 = vsyncpa %s2901, 1
    %2903 = vsyncpa [#allocation8], 1
    %2904 = vsyncpa [#allocation6], 1
    %s2905 = scalar_lea.sflag [#allocation6], 1
    %2906 = vsyncpa %s2905, 1

</llo_original>
